<compile_context>
chip_gen: v5e
topology: v5e:2x2
jax: 0.10.0
libtpu: 0.0.40
codegen_flags: <defaults>
</compile_context>

<pallas_src>
from functools import partial

import numpy as np
import jax
import jax.numpy as jnp
from jax.experimental import pallas as pl
from jax.experimental.pallas import tpu as pltpu

LRELU_SLOPE = 0.2
BN_EPS = 1e-5


def _lrelu(x):
    return jnp.where(x >= 0.0, x, LRELU_SLOPE * x)


# ----------------------------- Pallas kernel --------------------------------

def _fused_disc_kernel(sp_ref, w1_ref, m_ref, b1_ref, w2_ref, b2_ref, w3_ref,
                       o_ref, t3_ref, *, s3, c, so):
    """Whole SingleDisc forward (2 DownBlocks + 1-channel head) for ONE sample.

    sp_ref : (1, (s3+1)^2, 36*Cin) bf16 super-patches; row (u,t) holds the 6x6xCin input
             window feeding the 2x2 block of layer-1 outputs at padded s2d site (u,t).
    w1_ref : (36*Cin, 4c) bf16 expanded layer-1 weight (BN scale folded); column block
             (p*2+q)*c..+c produces the layer-1 output at padded position (2u+p, 2t+q).
    m_ref  : ((s3+1)^2, 4c) f32 0/1 mask implementing layer-2's zero padding.
    b1_ref : (1, 4c) f32 layer-1 bias tiled over the 4 parity blocks.
    w2_ref : (4c, 4c) bf16: the 4 stride-2 taps of layer 2 concatenated along N
             (rows ordered (p, q, cin), column block k = du*2+dt).
    b2_ref : (1, c) f32.   w3_ref : (16, c) f32 head per-tap weights (Cout == 1).
    o_ref  : (1, 1, so*so) f32.    t3_ref : (s3+1, s3+1, 4c) f32 scratch.
    """
    su = s3 + 1
    c4 = 4 * c

    # ---- layer 1: one MXU matmul; epilogue = bias + LeakyReLU + pad-mask (VPU) ----
    s_raw = jnp.dot(sp_ref[0], w1_ref[...],
                    preferred_element_type=jnp.float32)           # (su*su, 4c) f32
    s = _lrelu(s_raw + b1_ref[...]) * m_ref[...]                   # s2d'd padded activation

    # ---- layer 2: one MXU matmul, 4 taps concatenated along N; combine = 3 VPU adds ----
    t = jnp.dot(s.astype(jnp.bfloat16), w2_ref[...],
                preferred_element_type=jnp.float32)                # (su*su, 4c) f32
    t3_ref[...] = t.reshape(su, su, c4)
    b = (t3_ref[0:s3, 0:s3, 0:c]            # tap (du=0, dt=0)
         + t3_ref[0:s3, 1:su, c:2 * c]      # tap (du=0, dt=1)
         + t3_ref[1:su, 0:s3, 2 * c:3 * c]  # tap (du=1, dt=0)
         + t3_ref[1:su, 1:su, 3 * c:c4])    # tap (du=1, dt=1)     # (s3, s3, c)
    x2 = _lrelu(b + b2_ref[...])

    # ---- head: Cout == 1 -> VPU multiply-accumulate + one lane reduction ----
    acc = jnp.zeros((so * so, c), jnp.float32)
    for i in range(4):
        for j in range(4):
            acc = acc + x2[i:i + so, j:j + so, :].reshape(so * so, c) * w3_ref[i * 4 + j, :]
    o_ref[0, 0, :] = jnp.sum(acc, axis=-1)


def fused_forward_call(sp, w1, mask, b1, w2, b2, w3, *, n, c, s3, so):
    su = s3 + 1
    kernel = partial(_fused_disc_kernel, s3=s3, c=c, so=so)
    return pl.pallas_call(
        kernel,
        out_shape=jax.ShapeDtypeStruct((n, 1, so * so), jnp.float32),
        grid_spec=pltpu.PrefetchScalarGridSpec(
            num_scalar_prefetch=0,
            grid=(n,),                                    # one sample per step, TC-parallel
            in_specs=[
                pl.BlockSpec((1, su * su, sp.shape[-1]), lambda b: (b, 0, 0)),
                pl.BlockSpec(w1.shape, lambda b: (0, 0)),
                pl.BlockSpec(mask.shape, lambda b: (0, 0)),
                pl.BlockSpec(b1.shape, lambda b: (0, 0)),
                pl.BlockSpec(w2.shape, lambda b: (0, 0)),
                pl.BlockSpec(b2.shape, lambda b: (0, 0)),
                pl.BlockSpec(w3.shape, lambda b: (0, 0)),
            ],
            out_specs=pl.BlockSpec((1, 1, so * so), lambda b: (b, 0, 0)),
            scratch_shapes=[pltpu.VMEM((su, su, 4 * c), jnp.float32)],
        ),
        compiler_params=pltpu.CompilerParams(dimension_semantics=("parallel",)),
    )(sp, w1, mask, b1, w2, b2, w3)


# ------------------------------- JAX glue ------------------------------------

def superpatches(x_nhwc, s3):
    """Layer-1 im2col in 'super-patch' form: one row per padded s2d site (u,t) of the
    layer-1 output, columns (i6, j6, cin) over the 6x6 input window covering the 2x2
    block of layer-1 output pixels at that site.  Built once in XLA on the raw input."""
    N, H, W, C = x_nhwc.shape
    su = s3 + 1
    xpp = jnp.pad(x_nhwc, ((0, 0), (3, 3), (3, 3), (0, 0)))       # conv pad 1 + 2 extra
    taps = [xpp[:, i:i + 4 * su:4, j:j + 4 * su:4, :]
            for i in range(6) for j in range(6)]                  # each (N, su, su, C)
    sp = jnp.stack(taps, axis=3)                                  # (N, su, su, 36, C)
    return sp.reshape(N, su * su, 36 * C)


def _build_w1big(w_oihw, scale):
    """(Cout, Cin, 4, 4) conv weight + BN scale -> (36*Cin, 4*Cout) super-patch weight.
    Column block (p*2+q)*Cout produces the layer-1 output at padded offset (p, q)."""
    w = np.asarray(w_oihw, np.float32)
    scale = np.asarray(scale, np.float32)
    cout, cin, kh, kw = w.shape
    big = np.zeros((6 * 6 * cin, 4 * cout), np.float32)
    for p in range(2):
        for q in range(2):
            cblk = (p * 2 + q) * cout
            for i in range(kh):
                for j in range(kw):
                    i6, j6 = i + 2 * p, j + 2 * q
                    rblk = (i6 * 6 + j6) * cin
                    big[rblk:rblk + cin, cblk:cblk + cout] = w[:, :, i, j].T * scale[None, :]
    return big


def _build_w2all(w_oihw, scale):
    """(Cout, Cin, 4, 4) conv weight + BN scale -> (4*Cin, 4*Cout): the 4 stride-2 taps
    (du, dt) concatenated along N; rows ordered (p, q, cin) to match layer-1's output."""
    w = np.asarray(w_oihw, np.float32)
    scale = np.asarray(scale, np.float32)
    cout, cin, _, _ = w.shape
    big = np.zeros((4 * cin, 4 * cout), np.float32)
    for du in range(2):
        for dt in range(2):
            k = du * 2 + dt
            for p in range(2):
                for q in range(2):
                    i, j = 2 * du + p, 2 * dt + q
                    rblk = (p * 2 + q) * cin
                    big[rblk:rblk + cin, k * cout:(k + 1) * cout] = w[:, :, i, j].T * scale[None, :]
    return big


def _build_pad_mask(s3, c):
    """0/1 mask ((s3+1)^2, 4c): zeroes the s2d entries that are layer-2's conv padding."""
    su = s3 + 1
    mask = np.ones((su * su, 4 * c), np.float32)
    for u in range(su):
        for t in range(su):
            r = u * su + t
            for p in range(2):
                for q in range(2):
                    if ((p == 0 and u == 0) or (p == 1 and u == s3)
                            or (q == 0 and t == 0) or (q == 1 and t == s3)):
                        k = p * 2 + q
                        mask[r, k * c:(k + 1) * c] = 0.0
    return mask


def prep_fused_weights(params):
    assert len(params) == 3, "fused kernel is specialized to 2 DownBlocks + head"
    l1, l2, l3 = params
    assert l1["kind"] == "down" and l2["kind"] == "down" and l3["kind"] == "final"
    c = l1["w"].shape[0]
    assert l2["w"].shape[:2] == (c, c) and l3["w"].shape[:2] == (1, c)

    w1big = _build_w1big(l1["w"], l1["scale"])                       # (36*Cin, 4c)
    b1x = np.tile(np.asarray(l1["bias"], np.float32), 4).reshape(1, 4 * c)
    w2all = _build_w2all(l2["w"], l2["scale"])                       # (4c, 4c)
    b2 = np.asarray(l2["bias"], np.float32).reshape(1, c)
    w3 = np.asarray(l3["w"], np.float32)[0]                          # (c, 4, 4)
    w3taps = np.transpose(w3, (1, 2, 0)).reshape(16, c)              # row = i*4 + j

    return (jnp.asarray(w1big, jnp.bfloat16), jnp.asarray(b1x, jnp.float32),
            jnp.asarray(w2all, jnp.bfloat16), jnp.asarray(b2, jnp.float32),
            jnp.asarray(w3taps, jnp.float32))


@partial(jax.jit, static_argnames=("s3", "so", "ch"))
def _fused_forward(x_nhwc, w1, mask, b1, w2, b2, w3, *, s3, so, ch):
    n = x_nhwc.shape[0]
    sp = superpatches(x_nhwc, s3).astype(jnp.bfloat16)     # bf16 MXU operand, half the DMA
    out = fused_forward_call(sp, w1, mask, b1, w2, b2, w3, n=n, c=ch, s3=s3, so=so)
    return out.reshape(n, 1, so, so)


def single_disc_forward(params, x_nchw, c=None):
    """Equivalent of SingleDisc.forward(x, c) -- `c` is unused, exactly like the module."""
    del c
    x = jnp.transpose(x_nchw, (0, 2, 3, 1)).astype(jnp.float32)     # NCHW -> NHWC
    n, h, w, cin = x.shape
    assert h == w and h % 4 == 0 and h // 4 >= 4
    assert cin == params[0]["w"].shape[1]
    s3 = h // 4                    # spatial entering the head (after 2 DownBlocks)
    so = s3 - 3                    # head output spatial (4x4, stride 1, no pad)
    w1, b1, w2, b2, w3 = prep_fused_weights(params)
    ch = w2.shape[1] // 4
    mask = jnp.asarray(_build_pad_mask(s3, ch), jnp.float32)
    return _fused_forward(x, w1, mask, b1, w2, b2, w3, s3=s3, so=so, ch=ch)


# ------------------------------ init / reference -----------------------------

def init_conv(key, cout, cin, kh, kw):
    """PyTorch default conv init (kaiming_uniform a=sqrt(5)) + spectral normalization."""
    fan_in = cin * kh * kw
    bound = 1.0 / np.sqrt(fan_in)
    w = jax.random.uniform(key, (cout, cin, kh, kw), minval=-bound, maxval=bound,
                           dtype=jnp.float32)
    sigma = jnp.linalg.svd(w.reshape(cout, -1), compute_uv=False)[0]
    return w / sigma


def build_single_disc_params(key, nc=4, ndf=32, start_sz=32, end_sz=8):
    """Mirrors SingleDisc.__init__ layer construction (default head/separable/patch)."""
    channel_dict = {4: 512, 8: 512, 16: 256, 32: 128, 64: 64,
                    128: 64, 256: 32, 512: 16, 1024: 8}
    if start_sz not in channel_dict:
        sizes = np.array(list(channel_dict.keys()))
        start_sz = int(sizes[np.argmin(np.abs(sizes - start_sz))])
    nfc = dict(channel_dict) if ndf is None else {k: ndf for k in channel_dict}
    if nc is not None:
        nfc[start_sz] = nc

    layers = []
    keys = jax.random.split(key, 16)
    ki = 0
    sz = start_sz
    while sz > end_sz:
        cin, cout = nfc[sz], nfc[sz // 2]
        w = init_conv(keys[ki], cout, cin, 4, 4)
        ki += 1
        # BatchNorm2d defaults (gamma=1, beta=0, running_mean=0, running_var=1), eval mode.
        gamma = jnp.ones((cout,), jnp.float32)
        beta = jnp.zeros((cout,), jnp.float32)
        mean = jnp.zeros((cout,), jnp.float32)
        var = jnp.ones((cout,), jnp.float32)
        scale = gamma / jnp.sqrt(var + BN_EPS)
        bias = beta - mean * scale
        layers.append(dict(kind="down", w=w, scale=scale, bias=bias))
        sz //= 2

    w = init_conv(keys[ki], 1, nfc[end_sz], 4, 4)
    layers.append(dict(kind="final", w=w,
                       scale=jnp.ones((1,), jnp.float32),
                       bias=jnp.zeros((1,), jnp.float32)))
    return layers


def reference_forward(params, x_nchw):
    """Pure-JAX f32 reference (lax.conv) for correctness checking."""
    x = jnp.transpose(x_nchw, (0, 2, 3, 1)).astype(jnp.float32)
    for layer in params:
        stride, pad, act = (2, 1, True) if layer["kind"] == "down" else (1, 0, False)
        w_hwio = jnp.transpose(layer["w"], (2, 3, 1, 0))
        x = jax.lax.conv_general_dilated(
            x, w_hwio, (stride, stride), [(pad, pad), (pad, pad)],
            dimension_numbers=("NHWC", "HWIO", "NHWC"))
        x = x * layer["scale"] + layer["bias"]
        if act:
            x = jnp.where(x >= 0, x, LRELU_SLOPE * x)
    return jnp.transpose(x, (0, 3, 1, 2))


if __name__ == "__main__":
    key = jax.random.PRNGKey(0)
    kx, kp = jax.random.split(key)
    x = jax.random.normal(kx, (2, 4, 32, 32), dtype=jnp.float32)   # NCHW like PyTorch
    cond = jnp.zeros((2,), dtype=jnp.float32)                      # unused conditioning arg
    params = build_single_disc_params(kp, nc=4, ndf=32, start_sz=32, end_sz=8)

    out = jax.block_until_ready(single_disc_forward(params, x, cond))
    assert out.shape == (2, 1, 5, 5), out.shape

    ref = reference_forward(params, x)
    # bf16 MXU operands with f32 accumulation (per perf review) -> compare against the
    # pure-f32 reference with a bf16-appropriate tolerance; any indexing / layout bug
    # would show up as O(1) errors, far above this threshold.
    np.testing.assert_allclose(np.asarray(out), np.asarray(ref), rtol=3e-2, atol=3e-2)

    print("KERNEL_OK")
</pallas_src>

<mosaic_0001>
module attributes {stable_mosaic.version = 11 : i64} {
  func.func @_fused_disc_kernel(%arg0: i32, %arg1: memref<1x81x144xbf16, #tpu.memory_space<vmem>>, %arg2: memref<144x128xbf16, #tpu.memory_space<vmem>>, %arg3: memref<81x128xf32, #tpu.memory_space<vmem>>, %arg4: memref<1x128xf32, #tpu.memory_space<vmem>>, %arg5: memref<128x128xbf16, #tpu.memory_space<vmem>>, %arg6: memref<1x32xf32, #tpu.memory_space<vmem>>, %arg7: memref<16x32xf32, #tpu.memory_space<vmem>>, %arg8: memref<1x1x25xf32, #tpu.memory_space<vmem>>, %arg9: memref<9x9x128xf32, #tpu.memory_space<vmem>>) attributes {dimension_semantics = [#tpu.dimension_semantics<parallel>], iteration_bounds = array<i64: 2>, scalar_prefetch = 0 : i64, scratch_operands = 1 : i64, tpu.core_type = #tpu.core_type<tc>, window_params = [{transform_indices = @transform_0, window_bounds = array<i64: 1, 81, 144>}, {pipeline_mode = #tpu.pipeline_mode<synchronous>, transform_indices = @transform_1, window_bounds = array<i64: 144, 128>}, {pipeline_mode = #tpu.pipeline_mode<synchronous>, transform_indices = @transform_2, window_bounds = array<i64: 81, 128>}, {pipeline_mode = #tpu.pipeline_mode<synchronous>, transform_indices = @transform_3, window_bounds = array<i64: 1, 128>}, {pipeline_mode = #tpu.pipeline_mode<synchronous>, transform_indices = @transform_4, window_bounds = array<i64: 128, 128>}, {pipeline_mode = #tpu.pipeline_mode<synchronous>, transform_indices = @transform_5, window_bounds = array<i64: 1, 32>}, {pipeline_mode = #tpu.pipeline_mode<synchronous>, transform_indices = @transform_6, window_bounds = array<i64: 16, 32>}, {transform_indices = @transform_7, window_bounds = array<i64: 1, 1, 25>}]} {
    %c0 = arith.constant 0 : index
    %c0_0 = arith.constant 0 : index
    %c0_1 = arith.constant 0 : index
    %0 = vector.load %arg1[%c0, %c0_0, %c0_1] : memref<1x81x144xbf16, #tpu.memory_space<vmem>>, vector<1x81x144xbf16>
    %1 = vector.shape_cast %0 : vector<1x81x144xbf16> to vector<81x144xbf16>
    %c0_2 = arith.constant 0 : index
    %c0_3 = arith.constant 0 : index
    %2 = vector.load %arg2[%c0_2, %c0_3] : memref<144x128xbf16, #tpu.memory_space<vmem>>, vector<144x128xbf16>
    %cst = arith.constant dense<0.000000e+00> : vector<81x128xf32>
    %3 = tpu.matmul %1, %2, %cst {dimension_numbers = #tpu.dot_dimension_numbers<[1], [0], [0], [1], [0, 0, 1, 1], [], []>} : vector<81x144xbf16>, vector<144x128xbf16>, vector<81x128xf32> -> vector<81x128xf32>
    %c0_4 = arith.constant 0 : index
    %c0_5 = arith.constant 0 : index
    %4 = vector.load %arg4[%c0_4, %c0_5] : memref<1x128xf32, #tpu.memory_space<vmem>>, vector<1x128xf32>
    %5 = vector.broadcast %4 : vector<1x128xf32> to vector<81x128xf32>
    %6 = arith.addf %3, %5 : vector<81x128xf32>
    %cst_6 = arith.constant 0.000000e+00 : f32
    %7 = vector.broadcast %cst_6 : f32 to vector<81x128xf32>
    %8 = arith.cmpf oge, %6, %7 : vector<81x128xf32>
    %cst_7 = arith.constant 2.000000e-01 : f32
    %9 = vector.broadcast %cst_7 : f32 to vector<81x128xf32>
    %10 = arith.mulf %9, %6 : vector<81x128xf32>
    %11 = arith.select %8, %6, %10 : vector<81x128xi1>, vector<81x128xf32>
    %c0_8 = arith.constant 0 : index
    %c0_9 = arith.constant 0 : index
    %12 = vector.load %arg3[%c0_8, %c0_9] : memref<81x128xf32, #tpu.memory_space<vmem>>, vector<81x128xf32>
    %13 = arith.mulf %11, %12 : vector<81x128xf32>
    %14 = arith.truncf %13 : vector<81x128xf32> to vector<81x128xbf16>
    %c0_10 = arith.constant 0 : index
    %c0_11 = arith.constant 0 : index
    %15 = vector.load %arg5[%c0_10, %c0_11] : memref<128x128xbf16, #tpu.memory_space<vmem>>, vector<128x128xbf16>
    %cst_12 = arith.constant dense<0.000000e+00> : vector<81x128xf32>
    %16 = tpu.matmul %14, %15, %cst_12 {dimension_numbers = #tpu.dot_dimension_numbers<[1], [0], [0], [1], [0, 0, 1, 1], [], []>} : vector<81x128xbf16>, vector<128x128xbf16>, vector<81x128xf32> -> vector<81x128xf32>
    %17 = vector.shape_cast %16 : vector<81x128xf32> to vector<9x9x128xf32>
    %c0_13 = arith.constant 0 : index
    %c0_14 = arith.constant 0 : index
    %c0_15 = arith.constant 0 : index
    %18 = vector.load %arg9[%c0_13, %c0_14, %c0_15] : memref<9x9x128xf32, #tpu.memory_space<vmem>>, vector<9x9x128xf32>
    tpu.vector_store %arg9[%c0_13, %c0_14, %c0_15], %17 {strides = array<i32>} : memref<9x9x128xf32, #tpu.memory_space<vmem>>, vector<9x9x128xf32>,
    %c0_16 = arith.constant 0 : index
    %c0_17 = arith.constant 0 : index
    %c0_18 = arith.constant 0 : index
    %19 = vector.load %arg9[%c0_16, %c0_17, %c0_18] : memref<9x9x128xf32, #tpu.memory_space<vmem>>, vector<8x8x32xf32>
    %c0_19 = arith.constant 0 : index
    %c1 = arith.constant 1 : index
    %c32 = arith.constant 32 : index
    %20 = vector.load %arg9[%c0_19, %c1, %c32] : memref<9x9x128xf32, #tpu.memory_space<vmem>>, vector<8x8x32xf32>
    %21 = arith.addf %19, %20 : vector<8x8x32xf32>
    %c1_20 = arith.constant 1 : index
    %c0_21 = arith.constant 0 : index
    %c64 = arith.constant 64 : index
    %22 = vector.load %arg9[%c1_20, %c0_21, %c64] : memref<9x9x128xf32, #tpu.memory_space<vmem>>, vector<8x8x32xf32>
    %23 = arith.addf %21, %22 : vector<8x8x32xf32>
    %c1_22 = arith.constant 1 : index
    %c1_23 = arith.constant 1 : index
    %c96 = arith.constant 96 : index
    %24 = vector.load %arg9[%c1_22, %c1_23, %c96] : memref<9x9x128xf32, #tpu.memory_space<vmem>>, vector<8x8x32xf32>
    %25 = arith.addf %23, %24 : vector<8x8x32xf32>
    %c0_24 = arith.constant 0 : index
    %c0_25 = arith.constant 0 : index
    %26 = vector.load %arg6[%c0_24, %c0_25] : memref<1x32xf32, #tpu.memory_space<vmem>>, vector<1x32xf32>
    %27 = vector.shape_cast %26 : vector<1x32xf32> to vector<1x1x32xf32>
    %28 = vector.broadcast %27 : vector<1x1x32xf32> to vector<8x8x32xf32>
    %29 = arith.addf %25, %28 : vector<8x8x32xf32>
    %cst_26 = arith.constant 0.000000e+00 : f32
    %30 = vector.broadcast %cst_26 : f32 to vector<8x8x32xf32>
    %31 = arith.cmpf oge, %29, %30 : vector<8x8x32xf32>
    %cst_27 = arith.constant 2.000000e-01 : f32
    %32 = vector.broadcast %cst_27 : f32 to vector<8x8x32xf32>
    %33 = arith.mulf %32, %29 : vector<8x8x32xf32>
    %34 = arith.select %31, %29, %33 : vector<8x8x32xi1>, vector<8x8x32xf32>
    %cst_28 = arith.constant 0.000000e+00 : f32
    %35 = vector.broadcast %cst_28 : f32 to vector<25x32xf32>
    %36 = vector.extract_strided_slice %34 {offsets = [0, 0, 0], sizes = [5, 5, 32], strides = [1, 1, 1]} : vector<8x8x32xf32> to vector<5x5x32xf32>
    %37 = vector.shape_cast %36 : vector<5x5x32xf32> to vector<25x32xf32>
    %c0_29 = arith.constant 0 : index
    %c0_30 = arith.constant 0 : index
    %38 = vector.load %arg7[%c0_29, %c0_30] : memref<16x32xf32, #tpu.memory_space<vmem>>, vector<1x32xf32>
    %39 = vector.shape_cast %38 : vector<1x32xf32> to vector<32xf32>
    %40 = vector.shape_cast %39 : vector<32xf32> to vector<1x32xf32>
    %41 = vector.broadcast %40 : vector<1x32xf32> to vector<25x32xf32>
    %42 = arith.mulf %37, %41 : vector<25x32xf32>
    %43 = arith.addf %35, %42 : vector<25x32xf32>
    %44 = vector.extract_strided_slice %34 {offsets = [0, 1, 0], sizes = [5, 5, 32], strides = [1, 1, 1]} : vector<8x8x32xf32> to vector<5x5x32xf32>
    %45 = vector.shape_cast %44 : vector<5x5x32xf32> to vector<25x32xf32>
    %c1_31 = arith.constant 1 : index
    %c0_32 = arith.constant 0 : index
    %46 = vector.load %arg7[%c1_31, %c0_32] : memref<16x32xf32, #tpu.memory_space<vmem>>, vector<1x32xf32>
    %47 = vector.shape_cast %46 : vector<1x32xf32> to vector<32xf32>
    %48 = vector.shape_cast %47 : vector<32xf32> to vector<1x32xf32>
    %49 = vector.broadcast %48 : vector<1x32xf32> to vector<25x32xf32>
    %50 = arith.mulf %45, %49 : vector<25x32xf32>
    %51 = arith.addf %43, %50 : vector<25x32xf32>
    %52 = vector.extract_strided_slice %34 {offsets = [0, 2, 0], sizes = [5, 5, 32], strides = [1, 1, 1]} : vector<8x8x32xf32> to vector<5x5x32xf32>
    %53 = vector.shape_cast %52 : vector<5x5x32xf32> to vector<25x32xf32>
    %c2 = arith.constant 2 : index
    %c0_33 = arith.constant 0 : index
    %54 = vector.load %arg7[%c2, %c0_33] : memref<16x32xf32, #tpu.memory_space<vmem>>, vector<1x32xf32>
    %55 = vector.shape_cast %54 : vector<1x32xf32> to vector<32xf32>
    %56 = vector.shape_cast %55 : vector<32xf32> to vector<1x32xf32>
    %57 = vector.broadcast %56 : vector<1x32xf32> to vector<25x32xf32>
    %58 = arith.mulf %53, %57 : vector<25x32xf32>
    %59 = arith.addf %51, %58 : vector<25x32xf32>
    %60 = vector.extract_strided_slice %34 {offsets = [0, 3, 0], sizes = [5, 5, 32], strides = [1, 1, 1]} : vector<8x8x32xf32> to vector<5x5x32xf32>
    %61 = vector.shape_cast %60 : vector<5x5x32xf32> to vector<25x32xf32>
    %c3 = arith.constant 3 : index
    %c0_34 = arith.constant 0 : index
    %62 = vector.load %arg7[%c3, %c0_34] : memref<16x32xf32, #tpu.memory_space<vmem>>, vector<1x32xf32>
    %63 = vector.shape_cast %62 : vector<1x32xf32> to vector<32xf32>
    %64 = vector.shape_cast %63 : vector<32xf32> to vector<1x32xf32>
    %65 = vector.broadcast %64 : vector<1x32xf32> to vector<25x32xf32>
    %66 = arith.mulf %61, %65 : vector<25x32xf32>
    %67 = arith.addf %59, %66 : vector<25x32xf32>
    %68 = vector.extract_strided_slice %34 {offsets = [1, 0, 0], sizes = [5, 5, 32], strides = [1, 1, 1]} : vector<8x8x32xf32> to vector<5x5x32xf32>
    %69 = vector.shape_cast %68 : vector<5x5x32xf32> to vector<25x32xf32>
    %c4 = arith.constant 4 : index
    %c0_35 = arith.constant 0 : index
    %70 = vector.load %arg7[%c4, %c0_35] : memref<16x32xf32, #tpu.memory_space<vmem>>, vector<1x32xf32>
    %71 = vector.shape_cast %70 : vector<1x32xf32> to vector<32xf32>
    %72 = vector.shape_cast %71 : vector<32xf32> to vector<1x32xf32>
    %73 = vector.broadcast %72 : vector<1x32xf32> to vector<25x32xf32>
    %74 = arith.mulf %69, %73 : vector<25x32xf32>
    %75 = arith.addf %67, %74 : vector<25x32xf32>
    %76 = vector.extract_strided_slice %34 {offsets = [1, 1, 0], sizes = [5, 5, 32], strides = [1, 1, 1]} : vector<8x8x32xf32> to vector<5x5x32xf32>
    %77 = vector.shape_cast %76 : vector<5x5x32xf32> to vector<25x32xf32>
    %c5 = arith.constant 5 : index
    %c0_36 = arith.constant 0 : index
    %78 = vector.load %arg7[%c5, %c0_36] : memref<16x32xf32, #tpu.memory_space<vmem>>, vector<1x32xf32>
    %79 = vector.shape_cast %78 : vector<1x32xf32> to vector<32xf32>
    %80 = vector.shape_cast %79 : vector<32xf32> to vector<1x32xf32>
    %81 = vector.broadcast %80 : vector<1x32xf32> to vector<25x32xf32>
    %82 = arith.mulf %77, %81 : vector<25x32xf32>
    %83 = arith.addf %75, %82 : vector<25x32xf32>
    %84 = vector.extract_strided_slice %34 {offsets = [1, 2, 0], sizes = [5, 5, 32], strides = [1, 1, 1]} : vector<8x8x32xf32> to vector<5x5x32xf32>
    %85 = vector.shape_cast %84 : vector<5x5x32xf32> to vector<25x32xf32>
    %c6 = arith.constant 6 : index
    %c0_37 = arith.constant 0 : index
    %86 = vector.load %arg7[%c6, %c0_37] : memref<16x32xf32, #tpu.memory_space<vmem>>, vector<1x32xf32>
    %87 = vector.shape_cast %86 : vector<1x32xf32> to vector<32xf32>
    %88 = vector.shape_cast %87 : vector<32xf32> to vector<1x32xf32>
    %89 = vector.broadcast %88 : vector<1x32xf32> to vector<25x32xf32>
    %90 = arith.mulf %85, %89 : vector<25x32xf32>
    %91 = arith.addf %83, %90 : vector<25x32xf32>
    %92 = vector.extract_strided_slice %34 {offsets = [1, 3, 0], sizes = [5, 5, 32], strides = [1, 1, 1]} : vector<8x8x32xf32> to vector<5x5x32xf32>
    %93 = vector.shape_cast %92 : vector<5x5x32xf32> to vector<25x32xf32>
    %c7 = arith.constant 7 : index
    %c0_38 = arith.constant 0 : index
    %94 = vector.load %arg7[%c7, %c0_38] : memref<16x32xf32, #tpu.memory_space<vmem>>, vector<1x32xf32>
    %95 = vector.shape_cast %94 : vector<1x32xf32> to vector<32xf32>
    %96 = vector.shape_cast %95 : vector<32xf32> to vector<1x32xf32>
    %97 = vector.broadcast %96 : vector<1x32xf32> to vector<25x32xf32>
    %98 = arith.mulf %93, %97 : vector<25x32xf32>
    %99 = arith.addf %91, %98 : vector<25x32xf32>
    %100 = vector.extract_strided_slice %34 {offsets = [2, 0, 0], sizes = [5, 5, 32], strides = [1, 1, 1]} : vector<8x8x32xf32> to vector<5x5x32xf32>
    %101 = vector.shape_cast %100 : vector<5x5x32xf32> to vector<25x32xf32>
    %c8 = arith.constant 8 : index
    %c0_39 = arith.constant 0 : index
    %102 = vector.load %arg7[%c8, %c0_39] : memref<16x32xf32, #tpu.memory_space<vmem>>, vector<1x32xf32>
    %103 = vector.shape_cast %102 : vector<1x32xf32> to vector<32xf32>
    %104 = vector.shape_cast %103 : vector<32xf32> to vector<1x32xf32>
    %105 = vector.broadcast %104 : vector<1x32xf32> to vector<25x32xf32>
    %106 = arith.mulf %101, %105 : vector<25x32xf32>
    %107 = arith.addf %99, %106 : vector<25x32xf32>
    %108 = vector.extract_strided_slice %34 {offsets = [2, 1, 0], sizes = [5, 5, 32], strides = [1, 1, 1]} : vector<8x8x32xf32> to vector<5x5x32xf32>
    %109 = vector.shape_cast %108 : vector<5x5x32xf32> to vector<25x32xf32>
    %c9 = arith.constant 9 : index
    %c0_40 = arith.constant 0 : index
    %110 = vector.load %arg7[%c9, %c0_40] : memref<16x32xf32, #tpu.memory_space<vmem>>, vector<1x32xf32>
    %111 = vector.shape_cast %110 : vector<1x32xf32> to vector<32xf32>
    %112 = vector.shape_cast %111 : vector<32xf32> to vector<1x32xf32>
    %113 = vector.broadcast %112 : vector<1x32xf32> to vector<25x32xf32>
    %114 = arith.mulf %109, %113 : vector<25x32xf32>
    %115 = arith.addf %107, %114 : vector<25x32xf32>
    %116 = vector.extract_strided_slice %34 {offsets = [2, 2, 0], sizes = [5, 5, 32], strides = [1, 1, 1]} : vector<8x8x32xf32> to vector<5x5x32xf32>
    %117 = vector.shape_cast %116 : vector<5x5x32xf32> to vector<25x32xf32>
    %c10 = arith.constant 10 : index
    %c0_41 = arith.constant 0 : index
    %118 = vector.load %arg7[%c10, %c0_41] : memref<16x32xf32, #tpu.memory_space<vmem>>, vector<1x32xf32>
    %119 = vector.shape_cast %118 : vector<1x32xf32> to vector<32xf32>
    %120 = vector.shape_cast %119 : vector<32xf32> to vector<1x32xf32>
    %121 = vector.broadcast %120 : vector<1x32xf32> to vector<25x32xf32>
    %122 = arith.mulf %117, %121 : vector<25x32xf32>
    %123 = arith.addf %115, %122 : vector<25x32xf32>
    %124 = vector.extract_strided_slice %34 {offsets = [2, 3, 0], sizes = [5, 5, 32], strides = [1, 1, 1]} : vector<8x8x32xf32> to vector<5x5x32xf32>
    %125 = vector.shape_cast %124 : vector<5x5x32xf32> to vector<25x32xf32>
    %c11 = arith.constant 11 : index
    %c0_42 = arith.constant 0 : index
    %126 = vector.load %arg7[%c11, %c0_42] : memref<16x32xf32, #tpu.memory_space<vmem>>, vector<1x32xf32>
    %127 = vector.shape_cast %126 : vector<1x32xf32> to vector<32xf32>
    %128 = vector.shape_cast %127 : vector<32xf32> to vector<1x32xf32>
    %129 = vector.broadcast %128 : vector<1x32xf32> to vector<25x32xf32>
    %130 = arith.mulf %125, %129 : vector<25x32xf32>
    %131 = arith.addf %123, %130 : vector<25x32xf32>
    %132 = vector.extract_strided_slice %34 {offsets = [3, 0, 0], sizes = [5, 5, 32], strides = [1, 1, 1]} : vector<8x8x32xf32> to vector<5x5x32xf32>
    %133 = vector.shape_cast %132 : vector<5x5x32xf32> to vector<25x32xf32>
    %c12 = arith.constant 12 : index
    %c0_43 = arith.constant 0 : index
    %134 = vector.load %arg7[%c12, %c0_43] : memref<16x32xf32, #tpu.memory_space<vmem>>, vector<1x32xf32>
    %135 = vector.shape_cast %134 : vector<1x32xf32> to vector<32xf32>
    %136 = vector.shape_cast %135 : vector<32xf32> to vector<1x32xf32>
    %137 = vector.broadcast %136 : vector<1x32xf32> to vector<25x32xf32>
    %138 = arith.mulf %133, %137 : vector<25x32xf32>
    %139 = arith.addf %131, %138 : vector<25x32xf32>
    %140 = vector.extract_strided_slice %34 {offsets = [3, 1, 0], sizes = [5, 5, 32], strides = [1, 1, 1]} : vector<8x8x32xf32> to vector<5x5x32xf32>
    %141 = vector.shape_cast %140 : vector<5x5x32xf32> to vector<25x32xf32>
    %c13 = arith.constant 13 : index
    %c0_44 = arith.constant 0 : index
    %142 = vector.load %arg7[%c13, %c0_44] : memref<16x32xf32, #tpu.memory_space<vmem>>, vector<1x32xf32>
    %143 = vector.shape_cast %142 : vector<1x32xf32> to vector<32xf32>
    %144 = vector.shape_cast %143 : vector<32xf32> to vector<1x32xf32>
    %145 = vector.broadcast %144 : vector<1x32xf32> to vector<25x32xf32>
    %146 = arith.mulf %141, %145 : vector<25x32xf32>
    %147 = arith.addf %139, %146 : vector<25x32xf32>
    %148 = vector.extract_strided_slice %34 {offsets = [3, 2, 0], sizes = [5, 5, 32], strides = [1, 1, 1]} : vector<8x8x32xf32> to vector<5x5x32xf32>
    %149 = vector.shape_cast %148 : vector<5x5x32xf32> to vector<25x32xf32>
    %c14 = arith.constant 14 : index
    %c0_45 = arith.constant 0 : index
    %150 = vector.load %arg7[%c14, %c0_45] : memref<16x32xf32, #tpu.memory_space<vmem>>, vector<1x32xf32>
    %151 = vector.shape_cast %150 : vector<1x32xf32> to vector<32xf32>
    %152 = vector.shape_cast %151 : vector<32xf32> to vector<1x32xf32>
    %153 = vector.broadcast %152 : vector<1x32xf32> to vector<25x32xf32>
    %154 = arith.mulf %149, %153 : vector<25x32xf32>
    %155 = arith.addf %147, %154 : vector<25x32xf32>
    %156 = vector.extract_strided_slice %34 {offsets = [3, 3, 0], sizes = [5, 5, 32], strides = [1, 1, 1]} : vector<8x8x32xf32> to vector<5x5x32xf32>
    %157 = vector.shape_cast %156 : vector<5x5x32xf32> to vector<25x32xf32>
    %c15 = arith.constant 15 : index
    %c0_46 = arith.constant 0 : index
    %158 = vector.load %arg7[%c15, %c0_46] : memref<16x32xf32, #tpu.memory_space<vmem>>, vector<1x32xf32>
    %159 = vector.shape_cast %158 : vector<1x32xf32> to vector<32xf32>
    %160 = vector.shape_cast %159 : vector<32xf32> to vector<1x32xf32>
    %161 = vector.broadcast %160 : vector<1x32xf32> to vector<25x32xf32>
    %162 = arith.mulf %157, %161 : vector<25x32xf32>
    %163 = arith.addf %155, %162 : vector<25x32xf32>
    %cst_47 = arith.constant dense<0.000000e+00> : vector<25xf32>
    %164 = vector.multi_reduction <add>, %163, %cst_47 [1] : vector<25x32xf32> to vector<25xf32>
    %c0_48 = arith.constant 0 : index
    %c0_49 = arith.constant 0 : index
    %c0_50 = arith.constant 0 : index
    %165 = vector.load %arg8[%c0_48, %c0_49, %c0_50] : memref<1x1x25xf32, #tpu.memory_space<vmem>>, vector<1x1x25xf32>
    %166 = vector.shape_cast %165 : vector<1x1x25xf32> to vector<25xf32>
    %167 = vector.shape_cast %164 : vector<25xf32> to vector<1x1x25xf32>
    tpu.vector_store %arg8[%c0_48, %c0_49, %c0_50], %167 {strides = array<i32>} : memref<1x1x25xf32, #tpu.memory_space<vmem>>, vector<1x1x25xf32>,
    return
  }
  func.func @transform_0(%arg0: i32) -> (i32, i32, i32) {
    %c0_i32 = arith.constant 0 : i32
    %c0_i32_0 = arith.constant 0 : i32
    %c0_i32_1 = arith.constant 0 : i32
    return %arg0, %c0_i32, %c0_i32_0 : i32, i32, i32
  }
  func.func @transform_1(%arg0: i32) -> (i32, i32) {
    %c0_i32 = arith.constant 0 : i32
    %c0_i32_0 = arith.constant 0 : i32
    %c0_i32_1 = arith.constant 0 : i32
    return %c0_i32, %c0_i32_0 : i32, i32
  }
  func.func @transform_2(%arg0: i32) -> (i32, i32) {
    %c0_i32 = arith.constant 0 : i32
    %c0_i32_0 = arith.constant 0 : i32
    %c0_i32_1 = arith.constant 0 : i32
    return %c0_i32, %c0_i32_0 : i32, i32
  }
  func.func @transform_3(%arg0: i32) -> (i32, i32) {
    %c0_i32 = arith.constant 0 : i32
    %c0_i32_0 = arith.constant 0 : i32
    %c0_i32_1 = arith.constant 0 : i32
    return %c0_i32, %c0_i32_0 : i32, i32
  }
  func.func @transform_4(%arg0: i32) -> (i32, i32) {
    %c0_i32 = arith.constant 0 : i32
    %c0_i32_0 = arith.constant 0 : i32
    %c0_i32_1 = arith.constant 0 : i32
    return %c0_i32, %c0_i32_0 : i32, i32
  }
  func.func @transform_5(%arg0: i32) -> (i32, i32) {
    %c0_i32 = arith.constant 0 : i32
    %c0_i32_0 = arith.constant 0 : i32
    %c0_i32_1 = arith.constant 0 : i32
    return %c0_i32, %c0_i32_0 : i32, i32
  }
  func.func @transform_6(%arg0: i32) -> (i32, i32) {
    %c0_i32 = arith.constant 0 : i32
    %c0_i32_0 = arith.constant 0 : i32
    %c0_i32_1 = arith.constant 0 : i32
    return %c0_i32, %c0_i32_0 : i32, i32
  }
  func.func @transform_7(%arg0: i32) -> (i32, i32, i32) {
    %c0_i32 = arith.constant 0 : i32
    %c0_i32_0 = arith.constant 0 : i32
    %c0_i32_1 = arith.constant 0 : i32
    return %arg0, %c0_i32, %c0_i32_0 : i32, i32, i32
  }
}

</mosaic_0001>

<llo_original>
// kernel: _fused_forward.1
$region0: #{_fused_forward.1}
  #allocation0 [shape = 'u32[]', space=smem, size = 0x4, offset = 0x4, fixed_abs, tag = 'smem constant byte address 0x4 - core index']
  #allocation1 [shape = 'u32[72,128]{1,0:T(1,128)}', space=vmem, size = 0x9000, scoped, tag = 'internal scratch']
  #allocation2 [shape = 'f32[9,9,128]{2,1,0:T(8,128)}', space=vmem, size = 0x12000, scoped, tag = 'scratch operand']
  %s0 = inlined_call_operand.vmem [shape: bf16[2,81,144], index: 0, kind: input, shape index: {}]
  %s1 = inlined_call_operand.vmem [shape: bf16[144,128], index: 1, kind: input, shape index: {}]
  %s2 = inlined_call_operand.vmem [shape: f32[81,128], index: 2, kind: input, shape index: {}]
  %s3 = inlined_call_operand.vmem [shape: f32[1,128], index: 3, kind: input, shape index: {}]
  %s4 = inlined_call_operand.vmem [shape: bf16[128,128], index: 4, kind: input, shape index: {}]
  %s5 = inlined_call_operand.vmem [shape: f32[1,32], index: 5, kind: input, shape index: {}]
  %s6 = inlined_call_operand.vmem [shape: f32[16,32], index: 6, kind: input, shape index: {}]
  %s7 = inlined_call_operand.vmem [shape: f32[2,1,25], index: 7, kind: output, shape index: {}]
  %s8 = sld [smem:[#allocation0]]
  $region61: #{_fused_forward.1} parent=0
    _
  %s10 = ssub.s32 1, %s8
  %s11 = scalar_select 0, %s10, %s8
  loop: start=0, step=1, limit=4
  $region2: #{_fused_forward.1} parent=0 // loop_pre_header
    _
  $region3: #{_fused_forward.1} parent=0 // loop_header
    %s13 = sphi 0, %s17
    %p14 = scmp.ge.s32.totalorder %s13, 4
    %s23 = sphi 0, %s25
    %s26 = sphi 0, %s23
    %s27 = sphi 0, %s26
    %s43 = sphi 0, %s27
    %s47 = sphi 0, %s47
    %s49 = sphi 0, %s47
    %s50 = sphi 0, %s49
    %s64 = sphi 0, %s50
    %s68 = sphi 0, %s68
    %s70 = sphi 0, %s68
    %s71 = sphi 0, %s70
    %s85 = sphi 0, %s71
    %s89 = sphi 0, %s89
    %s91 = sphi 0, %s89
    %s92 = sphi 0, %s91
    %s106 = sphi 0, %s92
    %s110 = sphi 0, %s110
    %s112 = sphi 0, %s110
    %s113 = sphi 0, %s112
    %s127 = sphi 0, %s113
    %s131 = sphi 0, %s131
    %s133 = sphi 0, %s131
    %s134 = sphi 0, %s133
    %s148 = sphi 0, %s134
    %s152 = sphi 0, %s152
    %s154 = sphi 0, %s152
    %s155 = sphi 0, %s154
    %s169 = sphi 0, %s155
    %s175 = sphi 0, %s177
    %s178 = sphi 0, %s175
    %s179 = sphi 0, %s178
    %s195 = sphi 0, %s179
  $region4: #{_fused_forward.1} parent=0 // loop_header_branch
    %16 = sbr.rel (%p14) target = $region8
  $region5: #{_fused_forward.1} parent=0 // loop_body
    %s18 = ssub.s32 %s13, 1
    %s19 = ssub.s32 %s13, 2
    %s20 = sadd.s32 %s13, 1
    %s21 = ssub.s32 %s13, %s20
    %p22 = scmp.eq.s32.totalorder %s21, 0
    %s24 = sadd.s32 %s23, 1
    %s25 = scalar_select %p22, %s23, %s24
    %p28 = pneg %p22
    %p29 = scmp.eq.s32.totalorder %s13, 1
    %p30 = por %p28, %p29
    %p31 = scmp.ne.s32.totalorder %s23, %s26
    %p32 = scmp.eq.s32.totalorder %s13, 0
    %p33 = por %p31, %p32
    %p34 = scmp.ne.s32.totalorder %s23, %s26
    %p35 = scmp.eq.s32.totalorder %s18, 1
    %p36 = por %p34, %p35
    %p37 = scmp.ne.s32.totalorder %s26, %s27
    %p38 = scmp.eq.s32.totalorder %s18, 0
    %p39 = por %p37, %p38
    %p40 = scmp.ne.s32.totalorder %s26, %s27
    %p41 = scmp.eq.s32.totalorder %s19, 1
    %p42 = por %p40, %p41
    %p44 = scmp.ne.s32.totalorder %s27, %s43
    %p45 = scmp.eq.s32.totalorder %s19, 0
    %p46 = por %p44, %p45
    %s48 = sadd.s32 %s47, 1
    %p51 = scmp.eq.s32.totalorder %s13, 1
    %p52 = scmp.ne.s32.totalorder %s47, %s49
    %p53 = scmp.eq.s32.totalorder %s13, 0
    %p54 = por %p52, %p53
    %p55 = scmp.ne.s32.totalorder %s47, %s49
    %p56 = scmp.eq.s32.totalorder %s18, 1
    %p57 = por %p55, %p56
    %p58 = scmp.ne.s32.totalorder %s49, %s50
    %p59 = scmp.eq.s32.totalorder %s18, 0
    %p60 = por %p58, %p59
    %p61 = scmp.ne.s32.totalorder %s49, %s50
    %p62 = scmp.eq.s32.totalorder %s19, 1
    %p63 = por %p61, %p62
    %p65 = scmp.ne.s32.totalorder %s50, %s64
    %p66 = scmp.eq.s32.totalorder %s19, 0
    %p67 = por %p65, %p66
    %s69 = sadd.s32 %s68, 1
    %p72 = scmp.eq.s32.totalorder %s13, 1
    %p73 = scmp.ne.s32.totalorder %s68, %s70
    %p74 = scmp.eq.s32.totalorder %s13, 0
    %p75 = por %p73, %p74
    %p76 = scmp.ne.s32.totalorder %s68, %s70
    %p77 = scmp.eq.s32.totalorder %s18, 1
    %p78 = por %p76, %p77
    %p79 = scmp.ne.s32.totalorder %s70, %s71
    %p80 = scmp.eq.s32.totalorder %s18, 0
    %p81 = por %p79, %p80
    %p82 = scmp.ne.s32.totalorder %s70, %s71
    %p83 = scmp.eq.s32.totalorder %s19, 1
    %p84 = por %p82, %p83
    %p86 = scmp.ne.s32.totalorder %s71, %s85
    %p87 = scmp.eq.s32.totalorder %s19, 0
    %p88 = por %p86, %p87
    %s90 = sadd.s32 %s89, 1
    %p93 = scmp.eq.s32.totalorder %s13, 1
    %p94 = scmp.ne.s32.totalorder %s89, %s91
    %p95 = scmp.eq.s32.totalorder %s13, 0
    %p96 = por %p94, %p95
    %p97 = scmp.ne.s32.totalorder %s89, %s91
    %p98 = scmp.eq.s32.totalorder %s18, 1
    %p99 = por %p97, %p98
    %p100 = scmp.ne.s32.totalorder %s91, %s92
    %p101 = scmp.eq.s32.totalorder %s18, 0
    %p102 = por %p100, %p101
    %p103 = scmp.ne.s32.totalorder %s91, %s92
    %p104 = scmp.eq.s32.totalorder %s19, 1
    %p105 = por %p103, %p104
    %p107 = scmp.ne.s32.totalorder %s92, %s106
    %p108 = scmp.eq.s32.totalorder %s19, 0
    %p109 = por %p107, %p108
    %s111 = sadd.s32 %s110, 1
    %p114 = scmp.eq.s32.totalorder %s13, 1
    %p115 = scmp.ne.s32.totalorder %s110, %s112
    %p116 = scmp.eq.s32.totalorder %s13, 0
    %p117 = por %p115, %p116
    %p118 = scmp.ne.s32.totalorder %s110, %s112
    %p119 = scmp.eq.s32.totalorder %s18, 1
    %p120 = por %p118, %p119
    %p121 = scmp.ne.s32.totalorder %s112, %s113
    %p122 = scmp.eq.s32.totalorder %s18, 0
    %p123 = por %p121, %p122
    %p124 = scmp.ne.s32.totalorder %s112, %s113
    %p125 = scmp.eq.s32.totalorder %s19, 1
    %p126 = por %p124, %p125
    %p128 = scmp.ne.s32.totalorder %s113, %s127
    %p129 = scmp.eq.s32.totalorder %s19, 0
    %p130 = por %p128, %p129
    %s132 = sadd.s32 %s131, 1
    %p135 = scmp.eq.s32.totalorder %s13, 1
    %p136 = scmp.ne.s32.totalorder %s131, %s133
    %p137 = scmp.eq.s32.totalorder %s13, 0
    %p138 = por %p136, %p137
    %p139 = scmp.ne.s32.totalorder %s131, %s133
    %p140 = scmp.eq.s32.totalorder %s18, 1
    %p141 = por %p139, %p140
    %p142 = scmp.ne.s32.totalorder %s133, %s134
    %p143 = scmp.eq.s32.totalorder %s18, 0
    %p144 = por %p142, %p143
    %p145 = scmp.ne.s32.totalorder %s133, %s134
    %p146 = scmp.eq.s32.totalorder %s19, 1
    %p147 = por %p145, %p146
    %p149 = scmp.ne.s32.totalorder %s134, %s148
    %p150 = scmp.eq.s32.totalorder %s19, 0
    %p151 = por %p149, %p150
    %s153 = sadd.s32 %s152, 1
    %p156 = scmp.eq.s32.totalorder %s13, 1
    %p157 = scmp.ne.s32.totalorder %s152, %s154
    %p158 = scmp.eq.s32.totalorder %s13, 0
    %p159 = por %p157, %p158
    %p160 = scmp.ne.s32.totalorder %s152, %s154
    %p161 = scmp.eq.s32.totalorder %s18, 1
    %p162 = por %p160, %p161
    %p163 = scmp.ne.s32.totalorder %s154, %s155
    %p164 = scmp.eq.s32.totalorder %s18, 0
    %p165 = por %p163, %p164
    %p166 = scmp.ne.s32.totalorder %s154, %s155
    %p167 = scmp.eq.s32.totalorder %s19, 1
    %p168 = por %p166, %p167
    %p170 = scmp.ne.s32.totalorder %s155, %s169
    %p171 = scmp.eq.s32.totalorder %s19, 0
    %p172 = por %p170, %p171
    %s173 = ssub.s32 %s13, %s20
    %p174 = scmp.eq.s32.totalorder %s173, 0
    %s176 = sadd.s32 %s175, 1
    %s177 = scalar_select %p174, %s175, %s176
    %p180 = pneg %p174
    %p181 = scmp.eq.s32.totalorder %s13, 1
    %p182 = por %p180, %p181
    %p183 = scmp.ne.s32.totalorder %s175, %s178
    %p184 = scmp.eq.s32.totalorder %s13, 0
    %p185 = por %p183, %p184
    %p186 = scmp.ne.s32.totalorder %s175, %s178
    %p187 = scmp.eq.s32.totalorder %s18, 1
    %p188 = por %p186, %p187
    %p189 = scmp.ne.s32.totalorder %s178, %s179
    %p190 = scmp.eq.s32.totalorder %s18, 0
    %p191 = por %p189, %p190
    %p192 = scmp.ne.s32.totalorder %s178, %s179
    %p193 = scmp.eq.s32.totalorder %s19, 1
    %p194 = por %p192, %p193
    %p196 = scmp.ne.s32.totalorder %s179, %s195
    %p197 = scmp.eq.s32.totalorder %s19, 0
    %p198 = por %p196, %p197
    %p199 = scmp.le.s32.totalorder 1, %s13
    %p200 = scmp.lt.s32.totalorder %s13, 3
    %p201 = pnand %p199, %p200
    %p202 = pneg %p201
    // Predicated region
    $region9: #{_fused_forward.1} parent=5 // pred_check
      _
    $region10: #{_fused_forward.1} parent=5 // pred_check_branch
      %204 = sbr.rel (%p201) target = $region12
    $region11: #{_fused_forward.1} parent=5 // pred_region
      %s205 = ssub.s32 %s13, 1
      // Predicated region
      $region13: #{_fused_forward.1} parent=11 // pred_check
        %p206 = pneg %p60
      $region14: #{_fused_forward.1} parent=11 // pred_check_branch
        %208 = sbr.rel (%p206) target = $region16
      $region15: #{_fused_forward.1} parent=11 // pred_region
        _
      $region16: #{_fused_forward.1} parent=11 // pred_fallthru
        _
      // Predicated region
      $region17: #{_fused_forward.1} parent=11 // pred_check
        %p209 = pneg %p81
      $region18: #{_fused_forward.1} parent=11 // pred_check_branch
        %211 = sbr.rel (%p209) target = $region20
      $region19: #{_fused_forward.1} parent=11 // pred_region
        _
      $region20: #{_fused_forward.1} parent=11 // pred_fallthru
        _
      // Predicated region
      $region21: #{_fused_forward.1} parent=11 // pred_check
        %p212 = pneg %p102
      $region22: #{_fused_forward.1} parent=11 // pred_check_branch
        %214 = sbr.rel (%p212) target = $region24
      $region23: #{_fused_forward.1} parent=11 // pred_region
        _
      $region24: #{_fused_forward.1} parent=11 // pred_fallthru
        _
      // Predicated region
      $region25: #{_fused_forward.1} parent=11 // pred_check
        %p215 = pneg %p123
      $region26: #{_fused_forward.1} parent=11 // pred_check_branch
        %217 = sbr.rel (%p215) target = $region28
      $region27: #{_fused_forward.1} parent=11 // pred_region
        _
      $region28: #{_fused_forward.1} parent=11 // pred_fallthru
        _
      // Predicated region
      $region29: #{_fused_forward.1} parent=11 // pred_check
        %p218 = pneg %p144
      $region30: #{_fused_forward.1} parent=11 // pred_check_branch
        %220 = sbr.rel (%p218) target = $region32
      $region31: #{_fused_forward.1} parent=11 // pred_region
        _
      $region32: #{_fused_forward.1} parent=11 // pred_fallthru
        _
      // Predicated region
      $region33: #{_fused_forward.1} parent=11 // pred_check
        %p221 = pneg %p165
      $region34: #{_fused_forward.1} parent=11 // pred_check_branch
        %223 = sbr.rel (%p221) target = $region36
      $region35: #{_fused_forward.1} parent=11 // pred_region
        _
      $region36: #{_fused_forward.1} parent=11 // pred_fallthru
        _
    $region12: #{_fused_forward.1} parent=5 // pred_fallthru
      _
    %p224 = scmp.lt.s32.totalorder %s13, 2
    // Predicated region
    $region37: #{_fused_forward.1} parent=5 // pred_check
      %p225 = pneg %p224
    $region38: #{_fused_forward.1} parent=5 // pred_check_branch
      %227 = sbr.rel (%p225) target = $region40
    $region39: #{_fused_forward.1} parent=5 // pred_region
      // Predicated region
      $region41: #{_fused_forward.1} parent=39 // pred_check
        %p228 = pneg %p33
      $region42: #{_fused_forward.1} parent=39 // pred_check_branch
        %230 = sbr.rel (%p228) target = $region44
      $region43: #{_fused_forward.1} parent=39 // pred_region
        %p231 = scmp.lt.s32.totalorder %s13, 1
        %s232 = scalar_select %p231, %s13, 1
        %s233 = smul.addr %s232, 22
        %s234 = smul.addr %s233, 4
        %s235 = scalar_lea.vmem %s0, %s234
      $region44: #{_fused_forward.1} parent=39 // pred_fallthru
        _
    $region40: #{_fused_forward.1} parent=5 // pred_fallthru
      _
    %p236 = scmp.le.s32.totalorder 1, %s13
    %p237 = scmp.lt.s32.totalorder %s13, 3
    %p238 = pnand %p236, %p237
    %p239 = pneg %p238
    // Predicated region
    $region45: #{_fused_forward.1} parent=5 // pred_check
      _
    $region46: #{_fused_forward.1} parent=5 // pred_check_branch
      %241 = sbr.rel (%p238) target = $region48
    $region47: #{_fused_forward.1} parent=5 // pred_region
      %s242 = ssub.s32 %s13, 1
      %p243 = scmp.lt.s32.totalorder %s18, 1
      %s244 = scalar_select %p243, %s18, 1
      %s245 = smul.addr %s244, 22
      %s246 = smul.addr %s245, 4
      %s247 = scalar_lea.vmem %s0, %s246
      %p248 = pneg %p39
      %p249 = pneg %p36
      %p250 = pneg %p60
      %p251 = pneg %p57
      %p252 = pneg %p81
      %p253 = pneg %p78
      %p254 = pneg %p102
      %p255 = pneg %p99
      %p256 = pneg %p123
      %p257 = pneg %p120
      %p258 = pneg %p144
      %p259 = pneg %p141
      %p260 = pneg %p165
      %p261 = pneg %p162
      %p262 = pneg %p191
      %p263 = pneg %p188
      %p264 = scmp.lt.s32.totalorder %s18, 1
      %s265 = scalar_select %p264, %s18, 1
      %s266 = scalar_lea.vmem %s7, %s265
      %p267 = scmp.lt.s32.totalorder %s18, 1
      %s268 = scalar_select %p267, %s18, 1
      %s269 = smul.addr %s268, 22
      %s270 = smul.addr %s269, 4
      %s271 = scalar_lea.vmem %s0, %s270
      %p272 = scmp.lt.s32.totalorder %s18, 1
      %s273 = scalar_select %p272, %s18, 1
      %s274 = scalar_lea.vmem %s7, %s273
      %v276 = vld [vmem:[%s271] sm:$0xff]
      %v277 = vld [vmem:[%s271 + $0x8] sm:$0xff]
      %v278 = vld [vmem:[%s271 + $0x10] sm:$0xff]
      %v279 = vld [vmem:[%s271 + $0x18] sm:$0xff]
      %v280 = vld [vmem:[%s271 + $0x20] sm:$0xff]
      %v281 = vld [vmem:[%s271 + $0x28] sm:$0xff]
      %v282 = vld [vmem:[%s271 + $0x30] sm:$0xff]
      %v283 = vld [vmem:[%s271 + $0x38] sm:$0xff]
      %v284 = vld [vmem:[%s271 + $0x40] sm:$0xff]
      %v285 = vld [vmem:[%s271 + $0x48] sm:$0xff]
      %v286 = vld [vmem:[%s271 + $0x50] sm:$0x11]
      %v287 = vld [vmem:[%s1] sm:$0xf]
      %v288 = vld [vmem:[%s1 + $0x4] sm:$0xf]
      %v289 = vld [vmem:[%s1 + $0x8] sm:$0xf]
      %v290 = vld [vmem:[%s1 + $0xc] sm:$0xf]
      %v291 = vld [vmem:[%s1 + $0x10] sm:$0xf]
      %v292 = vld [vmem:[%s1 + $0x14] sm:$0xf]
      %v293 = vld [vmem:[%s1 + $0x18] sm:$0xf]
      %v294 = vld [vmem:[%s1 + $0x1c] sm:$0xf]
      %v295 = vld [vmem:[%s1 + $0x20] sm:$0xf]
      %v296 = vld [vmem:[%s1 + $0x24] sm:$0xf]
      %v297 = vld [vmem:[%s1 + $0x28] sm:$0xf]
      %v298 = vld [vmem:[%s1 + $0x2c] sm:$0xf]
      %v299 = vld [vmem:[%s1 + $0x30] sm:$0xf]
      %v300 = vld [vmem:[%s1 + $0x34] sm:$0xf]
      %v301 = vld [vmem:[%s1 + $0x38] sm:$0xf]
      %v302 = vld [vmem:[%s1 + $0x3c] sm:$0xf]
      %v303 = vld [vmem:[%s1 + $0x40] sm:$0xf]
      %v304 = vld [vmem:[%s1 + $0x44] sm:$0xf]
      %v305 = vld [vmem:[%s3] sm:$0x1]
      %v307 = vperm.slane %v305, 0
      %v320 = vunpack.c.l.b16 %v276
      %v321 = vunpack.c.h.b16 %v276
      %v322 = vunpack.c.l.b16 %v277
      %v323 = vunpack.c.h.b16 %v277
      %v324 = vunpack.c.l.b16 %v278
      %v325 = vunpack.c.h.b16 %v278
      %v326 = vunpack.c.l.b16 %v279
      %v327 = vunpack.c.h.b16 %v279
      %v328 = vunpack.c.l.b16 %v280
      %v329 = vunpack.c.h.b16 %v280
      %v330 = vunpack.c.l.b16 %v281
      %v331 = vunpack.c.h.b16 %v281
      %v332 = vunpack.c.l.b16 %v282
      %v333 = vunpack.c.h.b16 %v282
      %v334 = vunpack.c.l.b16 %v283
      %v335 = vunpack.c.h.b16 %v283
      %v336 = vunpack.c.l.b16 %v284
      %v337 = vunpack.c.h.b16 %v284
      %v338 = vunpack.c.l.b16 %v285
      %v339 = vunpack.c.h.b16 %v285
      %v340 = vunpack.c.l.b16 %v286
      %v341 = vunpack.c.h.b16 %v286
      %v342 = vpack.c.b16 %v322, %v320
      %v343 = vpack.c.b16 %v323, %v321
      %v344 = vpack.c.b16 %v326, %v324
      %v345 = vpack.c.b16 %v327, %v325
      %v346 = vpack.c.b16 %v330, %v328
      %v347 = vpack.c.b16 %v331, %v329
      %v348 = vpack.c.b16 %v334, %v332
      %v349 = vpack.c.b16 %v335, %v333
      %v350 = vpack.c.b16 %v338, %v336
      %v351 = vpack.c.b16 %v339, %v337
      %v352 = vpack.c.b16 %v340, %v340
      %v353 = vpack.c.b16 %v341, %v341
      %v378 = vunpack.c.l.b16 %v287
      %v379 = vunpack.c.l.b16 %v288
      %v380 = vunpack.c.l.b16 %v289
      %v381 = vunpack.c.l.b16 %v290
      %v382 = vunpack.c.l.b16 %v291
      %v383 = vunpack.c.l.b16 %v292
      %v384 = vunpack.c.l.b16 %v293
      %v385 = vunpack.c.l.b16 %v294
      %v386 = vunpack.c.l.b16 %v295
      %v387 = vunpack.c.l.b16 %v296
      %v388 = vunpack.c.l.b16 %v297
      %v389 = vunpack.c.l.b16 %v298
      %v390 = vunpack.c.l.b16 %v299
      %v391 = vunpack.c.l.b16 %v300
      %v392 = vunpack.c.l.b16 %v301
      %v393 = vunpack.c.l.b16 %v302
      %v394 = vunpack.c.l.b16 %v303
      %v395 = vunpack.c.l.b16 %v304
      %v396 = vpack.c.b16 %v379, %v378
      %v397 = vpack.c.b16 %v381, %v380
      %v398 = vpack.c.b16 %v383, %v382
      %v399 = vpack.c.b16 %v385, %v384
      %v400 = vpack.c.b16 %v387, %v386
      %v401 = vpack.c.b16 %v389, %v388
      %v402 = vpack.c.b16 %v391, %v390
      %v403 = vpack.c.b16 %v393, %v392
      %v404 = vpack.c.b16 %v395, %v394
      %vm414 = vcmask 130048
      %v416 = vsel %vm414, %v343, 0
      %v419 = vsel %vm414, %v345, 0
      %v422 = vsel %vm414, %v347, 0
      %v425 = vsel %vm414, %v349, 0
      %v428 = vsel %vm414, %v351, 0
      %v431 = vsel %vm414, %v353, 0
      %433 = vmatpush.bf16.msra.mxu0 %v403
      %434 = vmatpush.bf16.msra.mxu0 %v402
      %435 = vmatpush.bf16.msra.mxu0 %v401
      %436 = vmatpush.bf16.msra.mxu0 %v400
      %437 = vmatpush.bf16.msra.mxu0 %v399
      %438 = vmatpush.bf16.msra.mxu0 %v398
      %439 = vmatpush.bf16.msra.mxu0 %v397
      %440 = vmatpush.bf16.msra.mxu0 %v396
      %441 = vmatmul.bf16.gmra.mxu0 %v342
      %v442 = vpop.f32.mrf.mxu0
      %v443 = vadd.f32 %v307, %v442
      %v444 = vpop.f32.mrf.mxu0
      %v445 = vadd.f32 %v307, %v444
      %446 = vmatmul.bf16.gmra.mxu0 %v344
      %v447 = vpop.f32.mrf.mxu0
      %v448 = vadd.f32 %v307, %v447
      %v449 = vpop.f32.mrf.mxu0
      %v450 = vadd.f32 %v307, %v449
      %451 = vmatmul.bf16.gmra.mxu0 %v346
      %v452 = vpop.f32.mrf.mxu0
      %v453 = vadd.f32 %v307, %v452
      %v454 = vpop.f32.mrf.mxu0
      %v455 = vadd.f32 %v307, %v454
      %456 = vmatmul.bf16.gmra.mxu0 %v348
      %v457 = vpop.f32.mrf.mxu0
      %v458 = vadd.f32 %v307, %v457
      %v459 = vpop.f32.mrf.mxu0
      %v460 = vadd.f32 %v307, %v459
      %461 = vmatmul.bf16.gmra.mxu0 %v350
      %v462 = vpop.f32.mrf.mxu0
      %v463 = vadd.f32 %v307, %v462
      %v464 = vpop.f32.mrf.mxu0
      %v465 = vadd.f32 %v307, %v464
      %466 = vmatmul.bf16.gmra.mxu0 %v352
      %v467 = vpop.f32.mrf.mxu0
      %v468 = vadd.f32 %v307, %v467
      %v469 = vpop.f32.mrf.mxu0
      %470 = vdwg.mxu0
      %471 = vmatpush.bf16.msra.mxu0 0
      %472 = vmatpush.bf16.msra.mxu0 0
      %473 = vmatpush.bf16.msra.mxu0 0
      %474 = vmatpush.bf16.msra.mxu0 0
      %475 = vmatpush.bf16.msra.mxu0 0
      %476 = vmatpush.bf16.msra.mxu0 0
      %477 = vmatpush.bf16.msra.mxu0 0
      %478 = vmatpush.bf16.msra.mxu0 %v404
      %479 = vmatmul.bf16.gmra.mxu0 %v416
      %v480 = vpop.f32.mrf.mxu0
      %v481 = vadd.f32 %v443, %v480
      %v482 = vpop.f32.mrf.mxu0
      %v483 = vadd.f32 %v445, %v482
      %484 = vmatmul.bf16.gmra.mxu0 %v419
      %v485 = vpop.f32.mrf.mxu0
      %v486 = vadd.f32 %v448, %v485
      %v487 = vpop.f32.mrf.mxu0
      %v488 = vadd.f32 %v450, %v487
      %489 = vmatmul.bf16.gmra.mxu0 %v422
      %v490 = vpop.f32.mrf.mxu0
      %v491 = vadd.f32 %v453, %v490
      %v492 = vpop.f32.mrf.mxu0
      %v493 = vadd.f32 %v455, %v492
      %494 = vmatmul.bf16.gmra.mxu0 %v425
      %v495 = vpop.f32.mrf.mxu0
      %v496 = vadd.f32 %v458, %v495
      %v497 = vpop.f32.mrf.mxu0
      %v498 = vadd.f32 %v460, %v497
      %499 = vmatmul.bf16.gmra.mxu0 %v428
      %v500 = vpop.f32.mrf.mxu0
      %v501 = vadd.f32 %v463, %v500
      %v502 = vpop.f32.mrf.mxu0
      %v503 = vadd.f32 %v465, %v502
      %504 = vmatmul.bf16.gmra.mxu0 %v431
      %v505 = vpop.f32.mrf.mxu0
      %v506 = vadd.f32 %v468, %v505
      %v507 = vpop.f32.mrf.mxu0
      %508 = vdwg.mxu0
      %vm509 = vcmp.ge.f32.partialorder %v481, 0.0
      %vm510 = vcmp.ge.f32.partialorder %v483, 0.0
      %vm511 = vcmp.ge.f32.partialorder %v486, 0.0
      %vm512 = vcmp.ge.f32.partialorder %v488, 0.0
      %vm513 = vcmp.ge.f32.partialorder %v491, 0.0
      %vm514 = vcmp.ge.f32.partialorder %v493, 0.0
      %vm515 = vcmp.ge.f32.partialorder %v496, 0.0
      %vm516 = vcmp.ge.f32.partialorder %v498, 0.0
      %vm517 = vcmp.ge.f32.partialorder %v501, 0.0
      %vm518 = vcmp.ge.f32.partialorder %v503, 0.0
      %vm519 = vcmp.ge.f32.partialorder %v506, 0.0
      %v520 = vmul.f32 %v481, 0.2
      %v521 = vmul.f32 %v483, 0.2
      %v522 = vmul.f32 %v486, 0.2
      %v523 = vmul.f32 %v488, 0.2
      %v524 = vmul.f32 %v491, 0.2
      %v525 = vmul.f32 %v493, 0.2
      %v526 = vmul.f32 %v496, 0.2
      %v527 = vmul.f32 %v498, 0.2
      %v528 = vmul.f32 %v501, 0.2
      %v529 = vmul.f32 %v503, 0.2
      %v530 = vmul.f32 %v506, 0.2
      %v531 = vsel %vm509, %v481, %v520
      %v532 = vsel %vm510, %v483, %v521
      %v533 = vsel %vm511, %v486, %v522
      %v534 = vsel %vm512, %v488, %v523
      %v535 = vsel %vm513, %v491, %v524
      %v536 = vsel %vm514, %v493, %v525
      %v537 = vsel %vm515, %v496, %v526
      %v538 = vsel %vm516, %v498, %v527
      %v539 = vsel %vm517, %v501, %v528
      %v540 = vsel %vm518, %v503, %v529
      %v541 = vsel %vm519, %v506, %v530
      %v542 = vld [vmem:[%s2] sm:$0xff]
      %v543 = vld [vmem:[%s2 + $0x8] sm:$0xff]
      %v544 = vld [vmem:[%s2 + $0x10] sm:$0xff]
      %v545 = vld [vmem:[%s2 + $0x18] sm:$0xff]
      %v546 = vld [vmem:[%s2 + $0x20] sm:$0xff]
      %v547 = vld [vmem:[%s2 + $0x28] sm:$0xff]
      %v548 = vld [vmem:[%s2 + $0x30] sm:$0xff]
      %v549 = vld [vmem:[%s2 + $0x38] sm:$0xff]
      %v550 = vld [vmem:[%s2 + $0x40] sm:$0xff]
      %v551 = vld [vmem:[%s2 + $0x48] sm:$0xff]
      %v552 = vld [vmem:[%s2 + $0x50] sm:$0x1]
      %v553 = vmul.f32 %v531, %v542
      %v554 = vmul.f32 %v532, %v543
      %v555 = vmul.f32 %v533, %v544
      %v556 = vmul.f32 %v534, %v545
      %v557 = vmul.f32 %v535, %v546
      %v558 = vmul.f32 %v536, %v547
      %v559 = vmul.f32 %v537, %v548
      %v560 = vmul.f32 %v538, %v549
      %v561 = vmul.f32 %v539, %v550
      %v562 = vmul.f32 %v540, %v551
      %v563 = vmul.f32 %v541, %v552
      %v564 = vpack.c.bf16 %v554, %v553
      %v565 = vpack.c.bf16 %v556, %v555
      %v566 = vpack.c.bf16 %v558, %v557
      %v567 = vpack.c.bf16 %v560, %v559
      %v568 = vpack.c.bf16 %v562, %v561
      %v569 = vpack.c.bf16 %v563, %v563
      %v570 = vld [vmem:[%s4] sm:$0xf]
      %v571 = vld [vmem:[%s4 + $0x4] sm:$0xf]
      %v572 = vld [vmem:[%s4 + $0x8] sm:$0xf]
      %v573 = vld [vmem:[%s4 + $0xc] sm:$0xf]
      %v574 = vld [vmem:[%s4 + $0x10] sm:$0xf]
      %v575 = vld [vmem:[%s4 + $0x14] sm:$0xf]
      %v576 = vld [vmem:[%s4 + $0x18] sm:$0xf]
      %v577 = vld [vmem:[%s4 + $0x1c] sm:$0xf]
      %v578 = vld [vmem:[%s4 + $0x20] sm:$0xf]
      %v579 = vld [vmem:[%s4 + $0x24] sm:$0xf]
      %v580 = vld [vmem:[%s4 + $0x28] sm:$0xf]
      %v581 = vld [vmem:[%s4 + $0x2c] sm:$0xf]
      %v582 = vld [vmem:[%s4 + $0x30] sm:$0xf]
      %v583 = vld [vmem:[%s4 + $0x34] sm:$0xf]
      %v584 = vld [vmem:[%s4 + $0x38] sm:$0xf]
      %v585 = vld [vmem:[%s4 + $0x3c] sm:$0xf]
      %v602 = vunpack.c.l.b16 %v570
      %v603 = vunpack.c.l.b16 %v571
      %v604 = vunpack.c.l.b16 %v572
      %v605 = vunpack.c.l.b16 %v573
      %v606 = vunpack.c.l.b16 %v574
      %v607 = vunpack.c.l.b16 %v575
      %v608 = vunpack.c.l.b16 %v576
      %v609 = vunpack.c.l.b16 %v577
      %v610 = vunpack.c.l.b16 %v578
      %v611 = vunpack.c.l.b16 %v579
      %v612 = vunpack.c.l.b16 %v580
      %v613 = vunpack.c.l.b16 %v581
      %v614 = vunpack.c.l.b16 %v582
      %v615 = vunpack.c.l.b16 %v583
      %v616 = vunpack.c.l.b16 %v584
      %v617 = vunpack.c.l.b16 %v585
      %v618 = vpack.c.b16 %v603, %v602
      %v619 = vpack.c.b16 %v605, %v604
      %v620 = vpack.c.b16 %v607, %v606
      %v621 = vpack.c.b16 %v609, %v608
      %v622 = vpack.c.b16 %v611, %v610
      %v623 = vpack.c.b16 %v613, %v612
      %v624 = vpack.c.b16 %v615, %v614
      %v625 = vpack.c.b16 %v617, %v616
      %634 = vmatpush.bf16.msra.mxu0 %v625
      %635 = vmatpush.bf16.msra.mxu0 %v624
      %636 = vmatpush.bf16.msra.mxu0 %v623
      %637 = vmatpush.bf16.msra.mxu0 %v622
      %638 = vmatpush.bf16.msra.mxu0 %v621
      %639 = vmatpush.bf16.msra.mxu0 %v620
      %640 = vmatpush.bf16.msra.mxu0 %v619
      %641 = vmatpush.bf16.msra.mxu0 %v618
      %642 = vmatmul.bf16.gmra.mxu0 %v564
      %v643 = vpop.f32.mrf.mxu0
      %v644 = vadd.f32 0.0, %v643
      %v645 = vpop.f32.mrf.mxu0
      %v646 = vadd.f32 0.0, %v645
      %647 = vmatmul.bf16.gmra.mxu0 %v565
      %v648 = vpop.f32.mrf.mxu0
      %v649 = vadd.f32 0.0, %v648
      %v650 = vpop.f32.mrf.mxu0
      %v651 = vadd.f32 0.0, %v650
      %652 = vmatmul.bf16.gmra.mxu0 %v566
      %v653 = vpop.f32.mrf.mxu0
      %v654 = vadd.f32 0.0, %v653
      %v655 = vpop.f32.mrf.mxu0
      %v656 = vadd.f32 0.0, %v655
      %657 = vmatmul.bf16.gmra.mxu0 %v567
      %v658 = vpop.f32.mrf.mxu0
      %v659 = vadd.f32 0.0, %v658
      %v660 = vpop.f32.mrf.mxu0
      %v661 = vadd.f32 0.0, %v660
      %662 = vmatmul.bf16.gmra.mxu0 %v568
      %v663 = vpop.f32.mrf.mxu0
      %v664 = vadd.f32 0.0, %v663
      %v665 = vpop.f32.mrf.mxu0
      %v666 = vadd.f32 0.0, %v665
      %667 = vmatmul.bf16.gmra.mxu0 %v569
      %v668 = vpop.f32.mrf.mxu0
      %v669 = vadd.f32 0.0, %v668
      %v670 = vpop.f32.mrf.mxu0
      %671 = vdwg.mxu0
      %v683 = vrot.slane %v644, 1
      %v684 = vrot.slane %v644, 2
      %v685 = vrot.slane %v644, 3
      %v686 = vrot.slane %v644, 4
      %v687 = vrot.slane %v644, 5
      %v688 = vrot.slane %v644, 6
      %v689 = vrot.slane %v644, 7
      %v690 = vrot.slane %v646, 1
      %v691 = vrot.slane %v646, 2
      %v692 = vrot.slane %v646, 3
      %v693 = vrot.slane %v646, 4
      %v694 = vrot.slane %v646, 5
      %v695 = vrot.slane %v646, 6
      %v696 = vrot.slane %v646, 7
      %v697 = vrot.slane %v649, 1
      %v698 = vrot.slane %v649, 2
      %v699 = vrot.slane %v649, 3
      %v700 = vrot.slane %v649, 4
      %v701 = vrot.slane %v649, 5
      %v702 = vrot.slane %v649, 6
      %v703 = vrot.slane %v649, 7
      %v704 = vrot.slane %v651, 1
      %v705 = vrot.slane %v651, 2
      %v706 = vrot.slane %v651, 3
      %v707 = vrot.slane %v651, 4
      %v708 = vrot.slane %v651, 5
      %v709 = vrot.slane %v651, 6
      %v710 = vrot.slane %v651, 7
      %v711 = vrot.slane %v654, 1
      %v712 = vrot.slane %v654, 2
      %v713 = vrot.slane %v654, 3
      %v714 = vrot.slane %v654, 4
      %v715 = vrot.slane %v654, 5
      %v716 = vrot.slane %v654, 6
      %v717 = vrot.slane %v654, 7
      %v718 = vrot.slane %v656, 1
      %v719 = vrot.slane %v656, 2
      %v720 = vrot.slane %v656, 3
      %v721 = vrot.slane %v656, 4
      %v722 = vrot.slane %v656, 5
      %v723 = vrot.slane %v656, 6
      %v724 = vrot.slane %v656, 7
      %v725 = vrot.slane %v659, 1
      %v726 = vrot.slane %v659, 2
      %v727 = vrot.slane %v659, 3
      %v728 = vrot.slane %v659, 4
      %v729 = vrot.slane %v659, 5
      %v730 = vrot.slane %v659, 6
      %v731 = vrot.slane %v659, 7
      %v732 = vrot.slane %v661, 1
      %v733 = vrot.slane %v661, 2
      %v734 = vrot.slane %v661, 3
      %v735 = vrot.slane %v661, 4
      %v736 = vrot.slane %v661, 5
      %v737 = vrot.slane %v661, 6
      %v738 = vrot.slane %v661, 7
      %v739 = vrot.slane %v664, 1
      %v740 = vrot.slane %v664, 2
      %v741 = vrot.slane %v664, 3
      %v742 = vrot.slane %v664, 4
      %v743 = vrot.slane %v664, 5
      %v744 = vrot.slane %v664, 6
      %v745 = vrot.slane %v664, 7
      %v746 = vrot.slane %v666, 1
      %v747 = vrot.slane %v666, 2
      %v748 = vrot.slane %v666, 3
      %v749 = vrot.slane %v666, 4
      %v750 = vrot.slane %v666, 5
      %v751 = vrot.slane %v666, 6
      %v752 = vrot.slane %v666, 7
      %753 = vst [vmem:[#allocation1] ss:$9 sm:$0xff] %v644
      %s754 = scalar_lea.vmem [#allocation1], 1
      %755 = vst [vmem:[%s754] ss:$9 sm:$0xff] %v683
      %s756 = scalar_lea.vmem [#allocation1], 2
      %757 = vst [vmem:[%s756] ss:$9 sm:$0xff] %v684
      %s758 = scalar_lea.vmem [#allocation1], 3
      %759 = vst [vmem:[%s758] ss:$9 sm:$0xff] %v685
      %s760 = scalar_lea.vmem [#allocation1], 4
      %761 = vst [vmem:[%s760] ss:$9 sm:$0xff] %v686
      %s762 = scalar_lea.vmem [#allocation1], 5
      %763 = vst [vmem:[%s762] ss:$9 sm:$0xff] %v687
      %s764 = scalar_lea.vmem [#allocation1], 6
      %765 = vst [vmem:[%s764] ss:$9 sm:$0xff] %v688
      %s766 = scalar_lea.vmem [#allocation1], 7
      %767 = vst [vmem:[%s766] ss:$9 sm:$0xff] %v689
      %v768 = vld [vmem:[#allocation1] sm:$0xff]
      %769 = vst [vmem:[#allocation1] ss:$9 sm:$0xff] %v646
      %v770 = vld [vmem:[#allocation1] sm:$0xff]
      %771 = vst [vmem:[#allocation1] ss:$9 sm:$0xff] %v690
      %772 = vst [vmem:[%s754] ss:$9 sm:$0xff] %v691
      %773 = vst [vmem:[%s756] ss:$9 sm:$0xff] %v692
      %774 = vst [vmem:[%s758] ss:$9 sm:$0xff] %v693
      %775 = vst [vmem:[%s760] ss:$9 sm:$0xff] %v694
      %776 = vst [vmem:[%s762] ss:$9 sm:$0xff] %v695
      %777 = vst [vmem:[%s764] ss:$9 sm:$0xff] %v696
      %778 = vst [vmem:[%s766] ss:$9 sm:$0xff] %v649
      %v779 = vld [vmem:[#allocation1] sm:$0xff]
      %780 = vst [vmem:[#allocation1] ss:$9 sm:$0xff] %v697
      %v781 = vld [vmem:[#allocation1] sm:$0xff]
      %782 = vst [vmem:[#allocation1] ss:$9 sm:$0xff] %v698
      %783 = vst [vmem:[%s754] ss:$9 sm:$0xff] %v699
      %784 = vst [vmem:[%s756] ss:$9 sm:$0xff] %v700
      %785 = vst [vmem:[%s758] ss:$9 sm:$0xff] %v701
      %786 = vst [vmem:[%s760] ss:$9 sm:$0xff] %v702
      %787 = vst [vmem:[%s762] ss:$9 sm:$0xff] %v703
      %788 = vst [vmem:[%s764] ss:$9 sm:$0xff] %v651
      %789 = vst [vmem:[%s766] ss:$9 sm:$0xff] %v704
      %v790 = vld [vmem:[#allocation1] sm:$0xff]
      %791 = vst [vmem:[#allocation1] ss:$9 sm:$0xff] %v705
      %v792 = vld [vmem:[#allocation1] sm:$0xff]
      %793 = vst [vmem:[#allocation1] ss:$9 sm:$0xff] %v706
      %794 = vst [vmem:[%s754] ss:$9 sm:$0xff] %v707
      %795 = vst [vmem:[%s756] ss:$9 sm:$0xff] %v708
      %796 = vst [vmem:[%s758] ss:$9 sm:$0xff] %v709
      %797 = vst [vmem:[%s760] ss:$9 sm:$0xff] %v710
      %798 = vst [vmem:[%s762] ss:$9 sm:$0xff] %v654
      %799 = vst [vmem:[%s764] ss:$9 sm:$0xff] %v711
      %800 = vst [vmem:[%s766] ss:$9 sm:$0xff] %v712
      %v801 = vld [vmem:[#allocation1] sm:$0xff]
      %802 = vst [vmem:[#allocation1] ss:$9 sm:$0xff] %v713
      %v803 = vld [vmem:[#allocation1] sm:$0xff]
      %804 = vst [vmem:[#allocation1] ss:$9 sm:$0xff] %v714
      %805 = vst [vmem:[%s754] ss:$9 sm:$0xff] %v715
      %806 = vst [vmem:[%s756] ss:$9 sm:$0xff] %v716
      %807 = vst [vmem:[%s758] ss:$9 sm:$0xff] %v717
      %808 = vst [vmem:[%s760] ss:$9 sm:$0xff] %v656
      %809 = vst [vmem:[%s762] ss:$9 sm:$0xff] %v718
      %810 = vst [vmem:[%s764] ss:$9 sm:$0xff] %v719
      %811 = vst [vmem:[%s766] ss:$9 sm:$0xff] %v720
      %v812 = vld [vmem:[#allocation1] sm:$0xff]
      %813 = vst [vmem:[#allocation1] ss:$9 sm:$0xff] %v721
      %v814 = vld [vmem:[#allocation1] sm:$0xff]
      %815 = vst [vmem:[#allocation1] ss:$9 sm:$0xff] %v722
      %816 = vst [vmem:[%s754] ss:$9 sm:$0xff] %v723
      %817 = vst [vmem:[%s756] ss:$9 sm:$0xff] %v724
      %818 = vst [vmem:[%s758] ss:$9 sm:$0xff] %v659
      %819 = vst [vmem:[%s760] ss:$9 sm:$0xff] %v725
      %820 = vst [vmem:[%s762] ss:$9 sm:$0xff] %v726
      %821 = vst [vmem:[%s764] ss:$9 sm:$0xff] %v727
      %822 = vst [vmem:[%s766] ss:$9 sm:$0xff] %v728
      %v823 = vld [vmem:[#allocation1] sm:$0xff]
      %824 = vst [vmem:[#allocation1] ss:$9 sm:$0xff] %v729
      %v825 = vld [vmem:[#allocation1] sm:$0xff]
      %826 = vst [vmem:[#allocation1] ss:$9 sm:$0xff] %v730
      %827 = vst [vmem:[%s754] ss:$9 sm:$0xff] %v731
      %828 = vst [vmem:[%s756] ss:$9 sm:$0xff] %v661
      %829 = vst [vmem:[%s758] ss:$9 sm:$0xff] %v732
      %830 = vst [vmem:[%s760] ss:$9 sm:$0xff] %v733
      %831 = vst [vmem:[%s762] ss:$9 sm:$0xff] %v734
      %832 = vst [vmem:[%s764] ss:$9 sm:$0xff] %v735
      %833 = vst [vmem:[%s766] ss:$9 sm:$0xff] %v736
      %v834 = vld [vmem:[#allocation1] sm:$0xff]
      %835 = vst [vmem:[#allocation1] ss:$9 sm:$0xff] %v737
      %v836 = vld [vmem:[#allocation1] sm:$0xff]
      %837 = vst [vmem:[#allocation1] ss:$9 sm:$0xff] %v738
      %838 = vst [vmem:[%s754] ss:$9 sm:$0xff] %v664
      %839 = vst [vmem:[%s756] ss:$9 sm:$0xff] %v739
      %840 = vst [vmem:[%s758] ss:$9 sm:$0xff] %v740
      %841 = vst [vmem:[%s760] ss:$9 sm:$0xff] %v741
      %842 = vst [vmem:[%s762] ss:$9 sm:$0xff] %v742
      %843 = vst [vmem:[%s764] ss:$9 sm:$0xff] %v743
      %844 = vst [vmem:[%s766] ss:$9 sm:$0xff] %v744
      %v845 = vld [vmem:[#allocation1] sm:$0xff]
      %846 = vst [vmem:[#allocation1] ss:$9 sm:$0xff] %v745
      %v847 = vld [vmem:[#allocation1] sm:$0xff]
      %848 = vst [vmem:[#allocation1] ss:$9 sm:$0xff] %v666
      %849 = vst [vmem:[%s754] ss:$9 sm:$0xff] %v746
      %850 = vst [vmem:[%s756] ss:$9 sm:$0xff] %v747
      %851 = vst [vmem:[%s758] ss:$9 sm:$0xff] %v748
      %852 = vst [vmem:[%s760] ss:$9 sm:$0xff] %v749
      %853 = vst [vmem:[%s762] ss:$9 sm:$0xff] %v750
      %854 = vst [vmem:[%s764] ss:$9 sm:$0xff] %v751
      %855 = vst [vmem:[%s766] ss:$9 sm:$0xff] %v752
      %v856 = vld [vmem:[#allocation1] sm:$0xff]
      %857 = vst [vmem:[#allocation1] ss:$9 sm:$0xff] %v669
      %v858 = vld [vmem:[#allocation1] sm:$0xff]
      %877 = vst [vmem:[#allocation2] sm:$0xff] %v768
      %878 = vst [vmem:[#allocation2 + $0x8] sm:$0x1] %v770
      %879 = vst [vmem:[#allocation2 + $0x10] sm:$0xff] %v779
      %880 = vst [vmem:[#allocation2 + $0x18] sm:$0x1] %v781
      %881 = vst [vmem:[#allocation2 + $0x20] sm:$0xff] %v790
      %882 = vst [vmem:[#allocation2 + $0x28] sm:$0x1] %v792
      %883 = vst [vmem:[#allocation2 + $0x30] sm:$0xff] %v801
      %884 = vst [vmem:[#allocation2 + $0x38] sm:$0x1] %v803
      %885 = vst [vmem:[#allocation2 + $0x40] sm:$0xff] %v812
      %886 = vst [vmem:[#allocation2 + $0x48] sm:$0x1] %v814
      %887 = vst [vmem:[#allocation2 + $0x50] sm:$0xff] %v823
      %888 = vst [vmem:[#allocation2 + $0x58] sm:$0x1] %v825
      %889 = vst [vmem:[#allocation2 + $0x60] sm:$0xff] %v834
      %890 = vst [vmem:[#allocation2 + $0x68] sm:$0x1] %v836
      %891 = vst [vmem:[#allocation2 + $0x70] sm:$0xff] %v845
      %892 = vst [vmem:[#allocation2 + $0x78] sm:$0x1] %v847
      %893 = vst [vmem:[#allocation2 + $0x80] sm:$0xff] %v856
      %894 = vst [vmem:[#allocation2 + $0x88] sm:$0x1] %v858
      %v895 = vld [vmem:[#allocation2] sm:$0xff]
      %v896 = vld [vmem:[#allocation2 + $0x10] sm:$0xff]
      %v897 = vld [vmem:[#allocation2 + $0x20] sm:$0xff]
      %v898 = vld [vmem:[#allocation2 + $0x30] sm:$0xff]
      %v899 = vld [vmem:[#allocation2 + $0x40] sm:$0xff]
      %v900 = vld [vmem:[#allocation2 + $0x50] sm:$0xff]
      %v901 = vld [vmem:[#allocation2 + $0x60] sm:$0xff]
      %v902 = vld [vmem:[#allocation2 + $0x70] sm:$0xff]
      %v903 = vld [vmem:[#allocation2 + $0x1] sm:$0xff]
      %v904 = vld [vmem:[#allocation2 + $0x11] sm:$0xff]
      %v905 = vld [vmem:[#allocation2 + $0x21] sm:$0xff]
      %v906 = vld [vmem:[#allocation2 + $0x31] sm:$0xff]
      %v907 = vld [vmem:[#allocation2 + $0x41] sm:$0xff]
      %v908 = vld [vmem:[#allocation2 + $0x51] sm:$0xff]
      %v909 = vld [vmem:[#allocation2 + $0x61] sm:$0xff]
      %v910 = vld [vmem:[#allocation2 + $0x71] sm:$0xff]
      %919 = vrot.lane.b32.xlu0 %v903, 96
      %v920 = vpop.permute.xlu0 %919
      %921 = vrot.lane.b32.xlu0 %v904, 96
      %v922 = vpop.permute.xlu0 %921
      %923 = vrot.lane.b32.xlu0 %v905, 96
      %v924 = vpop.permute.xlu0 %923
      %925 = vrot.lane.b32.xlu0 %v906, 96
      %v926 = vpop.permute.xlu0 %925
      %927 = vrot.lane.b32.xlu0 %v907, 96
      %v928 = vpop.permute.xlu0 %927
      %929 = vrot.lane.b32.xlu0 %v908, 96
      %v930 = vpop.permute.xlu0 %929
      %931 = vrot.lane.b32.xlu0 %v909, 96
      %v932 = vpop.permute.xlu0 %931
      %933 = vrot.lane.b32.xlu0 %v910, 96
      %v934 = vpop.permute.xlu0 %933
      %v943 = vadd.f32 %v895, %v920
      %v944 = vadd.f32 %v896, %v922
      %v945 = vadd.f32 %v897, %v924
      %v946 = vadd.f32 %v898, %v926
      %v947 = vadd.f32 %v899, %v928
      %v948 = vadd.f32 %v900, %v930
      %v949 = vadd.f32 %v901, %v932
      %v950 = vadd.f32 %v902, %v934
      %s951 = scalar_lea.vmem [#allocation2], 16
      %v952 = vld [vmem:[%s951] sm:$0xff]
      %v953 = vld [vmem:[%s951 + $0x10] sm:$0xff]
      %v954 = vld [vmem:[%s951 + $0x20] sm:$0xff]
      %v955 = vld [vmem:[%s951 + $0x30] sm:$0xff]
      %v956 = vld [vmem:[%s951 + $0x40] sm:$0xff]
      %v957 = vld [vmem:[%s951 + $0x50] sm:$0xff]
      %v958 = vld [vmem:[%s951 + $0x60] sm:$0xff]
      %v959 = vld [vmem:[%s951 + $0x70] sm:$0xff]
      %968 = vrot.lane.b32.xlu0 %v952, 64
      %v969 = vpop.permute.xlu0 %968
      %970 = vrot.lane.b32.xlu0 %v953, 64
      %v971 = vpop.permute.xlu0 %970
      %972 = vrot.lane.b32.xlu0 %v954, 64
      %v973 = vpop.permute.xlu0 %972
      %974 = vrot.lane.b32.xlu0 %v955, 64
      %v975 = vpop.permute.xlu0 %974
      %976 = vrot.lane.b32.xlu0 %v956, 64
      %v977 = vpop.permute.xlu0 %976
      %978 = vrot.lane.b32.xlu0 %v957, 64
      %v979 = vpop.permute.xlu0 %978
      %980 = vrot.lane.b32.xlu0 %v958, 64
      %v981 = vpop.permute.xlu0 %980
      %982 = vrot.lane.b32.xlu0 %v959, 64
      %v983 = vpop.permute.xlu0 %982
      %v992 = vadd.f32 %v943, %v969
      %v993 = vadd.f32 %v944, %v971
      %v994 = vadd.f32 %v945, %v973
      %v995 = vadd.f32 %v946, %v975
      %v996 = vadd.f32 %v947, %v977
      %v997 = vadd.f32 %v948, %v979
      %v998 = vadd.f32 %v949, %v981
      %v999 = vadd.f32 %v950, %v983
      %v1000 = vld [vmem:[%s951 + $0x1] sm:$0xff]
      %v1001 = vld [vmem:[%s951 + $0x11] sm:$0xff]
      %v1002 = vld [vmem:[%s951 + $0x21] sm:$0xff]
      %v1003 = vld [vmem:[%s951 + $0x31] sm:$0xff]
      %v1004 = vld [vmem:[%s951 + $0x41] sm:$0xff]
      %v1005 = vld [vmem:[%s951 + $0x51] sm:$0xff]
      %v1006 = vld [vmem:[%s951 + $0x61] sm:$0xff]
      %v1007 = vld [vmem:[%s951 + $0x71] sm:$0xff]
      %1016 = vrot.lane.b32.xlu0 %v1000, 32
      %v1017 = vpop.permute.xlu0 %1016
      %1018 = vrot.lane.b32.xlu0 %v1001, 32
      %v1019 = vpop.permute.xlu0 %1018
      %1020 = vrot.lane.b32.xlu0 %v1002, 32
      %v1021 = vpop.permute.xlu0 %1020
      %1022 = vrot.lane.b32.xlu0 %v1003, 32
      %v1023 = vpop.permute.xlu0 %1022
      %1024 = vrot.lane.b32.xlu0 %v1004, 32
      %v1025 = vpop.permute.xlu0 %1024
      %1026 = vrot.lane.b32.xlu0 %v1005, 32
      %v1027 = vpop.permute.xlu0 %1026
      %1028 = vrot.lane.b32.xlu0 %v1006, 32
      %v1029 = vpop.permute.xlu0 %1028
      %1030 = vrot.lane.b32.xlu0 %v1007, 32
      %v1031 = vpop.permute.xlu0 %1030
      %v1040 = vadd.f32 %v992, %v1017
      %v1041 = vadd.f32 %v993, %v1019
      %v1042 = vadd.f32 %v994, %v1021
      %v1043 = vadd.f32 %v995, %v1023
      %v1044 = vadd.f32 %v996, %v1025
      %v1045 = vadd.f32 %v997, %v1027
      %v1046 = vadd.f32 %v998, %v1029
      %v1047 = vadd.f32 %v999, %v1031
      %v1048 = vld [vmem:[%s5] sm:$0x1]
      %v1050 = vperm.slane %v1048, 0
      %v1052 = vadd.f32 %v1040, %v1050
      %v1053 = vadd.f32 %v1041, %v1050
      %v1054 = vadd.f32 %v1042, %v1050
      %v1055 = vadd.f32 %v1043, %v1050
      %v1056 = vadd.f32 %v1044, %v1050
      %v1057 = vadd.f32 %v1045, %v1050
      %v1058 = vadd.f32 %v1046, %v1050
      %v1059 = vadd.f32 %v1047, %v1050
      %vm1060 = vcmp.ge.f32.partialorder %v1052, 0.0
      %vm1061 = vcmp.ge.f32.partialorder %v1053, 0.0
      %vm1062 = vcmp.ge.f32.partialorder %v1054, 0.0
      %vm1063 = vcmp.ge.f32.partialorder %v1055, 0.0
      %vm1064 = vcmp.ge.f32.partialorder %v1056, 0.0
      %vm1065 = vcmp.ge.f32.partialorder %v1057, 0.0
      %vm1066 = vcmp.ge.f32.partialorder %v1058, 0.0
      %vm1067 = vcmp.ge.f32.partialorder %v1059, 0.0
      %v1068 = vmul.f32 %v1052, 0.2
      %v1069 = vmul.f32 %v1053, 0.2
      %v1070 = vmul.f32 %v1054, 0.2
      %v1071 = vmul.f32 %v1055, 0.2
      %v1072 = vmul.f32 %v1056, 0.2
      %v1073 = vmul.f32 %v1057, 0.2
      %v1074 = vmul.f32 %v1058, 0.2
      %v1075 = vmul.f32 %v1059, 0.2
      %v1076 = vsel %vm1060, %v1052, %v1068
      %v1077 = vsel %vm1061, %v1053, %v1069
      %v1078 = vsel %vm1062, %v1054, %v1070
      %v1079 = vsel %vm1063, %v1055, %v1071
      %v1080 = vsel %vm1064, %v1056, %v1072
      %v1081 = vsel %vm1065, %v1057, %v1073
      %v1082 = vsel %vm1066, %v1058, %v1074
      %v1083 = vsel %vm1067, %v1059, %v1075
      %v1089 = vrot.slane %v1076, 1
      %v1090 = vrot.slane %v1076, 2
      %v1091 = vrot.slane %v1076, 3
      %v1092 = vrot.slane %v1076, 4
      %v1093 = vrot.slane %v1077, 1
      %v1094 = vrot.slane %v1077, 2
      %v1095 = vrot.slane %v1077, 3
      %v1096 = vrot.slane %v1077, 4
      %v1097 = vrot.slane %v1078, 1
      %v1098 = vrot.slane %v1078, 2
      %v1099 = vrot.slane %v1078, 3
      %v1100 = vrot.slane %v1078, 4
      %v1101 = vrot.slane %v1079, 1
      %v1102 = vrot.slane %v1079, 2
      %v1103 = vrot.slane %v1079, 3
      %v1104 = vrot.slane %v1079, 4
      %v1105 = vrot.slane %v1080, 1
      %v1106 = vrot.slane %v1080, 2
      %v1107 = vrot.slane %v1080, 3
      %v1108 = vrot.slane %v1080, 4
      %v1129 = vld [vmem:[%s6] sm:$0x1]
      %v1130 = vperm.slane %v1129, 0
      %v1132 = vrot.slane %v1130, 1
      %v1133 = vrot.slane %v1130, 2
      %v1134 = vrot.slane %v1130, 3
      %v1135 = vrot.slane %v1130, 4
      %v1136 = vrot.slane %v1130, 5
      %v1137 = vrot.slane %v1130, 6
      %v1138 = vrot.slane %v1130, 7
      %v1146 = vmul.f32 %v1076, %v1130
      %v1147 = vmul.f32 %v1089, %v1132
      %v1148 = vmul.f32 %v1090, %v1133
      %v1149 = vmul.f32 %v1091, %v1134
      %v1150 = vmul.f32 %v1092, %v1135
      %v1151 = vmul.f32 %v1077, %v1136
      %v1152 = vmul.f32 %v1093, %v1137
      %v1153 = vmul.f32 %v1094, %v1138
      %v1154 = vmul.f32 %v1095, %v1130
      %v1155 = vmul.f32 %v1096, %v1132
      %v1156 = vmul.f32 %v1078, %v1133
      %v1157 = vmul.f32 %v1097, %v1134
      %v1158 = vmul.f32 %v1098, %v1135
      %v1159 = vmul.f32 %v1099, %v1136
      %v1160 = vmul.f32 %v1100, %v1137
      %v1161 = vmul.f32 %v1079, %v1138
      %v1162 = vmul.f32 %v1101, %v1130
      %v1163 = vmul.f32 %v1102, %v1132
      %v1164 = vmul.f32 %v1103, %v1133
      %v1165 = vmul.f32 %v1104, %v1134
      %v1166 = vmul.f32 %v1080, %v1135
      %v1167 = vmul.f32 %v1105, %v1136
      %v1168 = vmul.f32 %v1106, %v1137
      %v1169 = vmul.f32 %v1107, %v1138
      %v1170 = vmul.f32 %v1108, %v1130
      %v1171 = vadd.f32 %v1146, 0.0
      %v1172 = vadd.f32 %v1147, 0.0
      %v1173 = vadd.f32 %v1148, 0.0
      %v1174 = vadd.f32 %v1149, 0.0
      %v1175 = vadd.f32 %v1150, 0.0
      %v1176 = vadd.f32 %v1151, 0.0
      %v1177 = vadd.f32 %v1152, 0.0
      %v1178 = vadd.f32 %v1153, 0.0
      %v1179 = vadd.f32 %v1154, 0.0
      %v1180 = vadd.f32 %v1155, 0.0
      %v1181 = vadd.f32 %v1156, 0.0
      %v1182 = vadd.f32 %v1157, 0.0
      %v1183 = vadd.f32 %v1158, 0.0
      %v1184 = vadd.f32 %v1159, 0.0
      %v1185 = vadd.f32 %v1160, 0.0
      %v1186 = vadd.f32 %v1161, 0.0
      %v1187 = vadd.f32 %v1162, 0.0
      %v1188 = vadd.f32 %v1163, 0.0
      %v1189 = vadd.f32 %v1164, 0.0
      %v1190 = vadd.f32 %v1165, 0.0
      %v1191 = vadd.f32 %v1166, 0.0
      %v1192 = vadd.f32 %v1167, 0.0
      %v1193 = vadd.f32 %v1168, 0.0
      %v1194 = vadd.f32 %v1169, 0.0
      %v1195 = vadd.f32 %v1170, 0.0
      %1196 = vst [vmem:[#allocation1] sm:$0xff] %v1076
      %s1197 = scalar_lea.vmem [#allocation1], 1
      %v1198 = vld [vmem:[%s1197] ss:$9 sm:$0xff]
      %s1199 = scalar_lea.vmem [#allocation1], 2
      %v1200 = vld [vmem:[%s1199] ss:$9 sm:$0xff]
      %s1201 = scalar_lea.vmem [#allocation1], 3
      %v1202 = vld [vmem:[%s1201] ss:$9 sm:$0xff]
      %s1203 = scalar_lea.vmem [#allocation1], 4
      %v1204 = vld [vmem:[%s1203] ss:$9 sm:$0xff]
      %s1205 = scalar_lea.vmem [#allocation1], 5
      %v1206 = vld [vmem:[%s1205] ss:$9 sm:$0xff]
      %1207 = vst [vmem:[#allocation1] sm:$0xff] %v1077
      %v1208 = vld [vmem:[%s1197] ss:$9 sm:$0xff]
      %v1209 = vld [vmem:[%s1199] ss:$9 sm:$0xff]
      %v1210 = vld [vmem:[%s1201] ss:$9 sm:$0xff]
      %v1211 = vld [vmem:[%s1203] ss:$9 sm:$0xff]
      %v1212 = vld [vmem:[%s1205] ss:$9 sm:$0xff]
      %1213 = vst [vmem:[#allocation1] sm:$0xff] %v1078
      %v1214 = vld [vmem:[%s1197] ss:$9 sm:$0xff]
      %v1215 = vld [vmem:[%s1199] ss:$9 sm:$0xff]
      %v1216 = vld [vmem:[%s1201] ss:$9 sm:$0xff]
      %v1217 = vld [vmem:[%s1203] ss:$9 sm:$0xff]
      %v1218 = vld [vmem:[%s1205] ss:$9 sm:$0xff]
      %1219 = vst [vmem:[#allocation1] sm:$0xff] %v1079
      %v1220 = vld [vmem:[%s1197] ss:$9 sm:$0xff]
      %v1221 = vld [vmem:[%s1199] ss:$9 sm:$0xff]
      %v1222 = vld [vmem:[%s1201] ss:$9 sm:$0xff]
      %v1223 = vld [vmem:[%s1203] ss:$9 sm:$0xff]
      %v1224 = vld [vmem:[%s1205] ss:$9 sm:$0xff]
      %1225 = vst [vmem:[#allocation1] sm:$0xff] %v1080
      %v1226 = vld [vmem:[%s1197] ss:$9 sm:$0xff]
      %v1227 = vld [vmem:[%s1199] ss:$9 sm:$0xff]
      %v1228 = vld [vmem:[%s1201] ss:$9 sm:$0xff]
      %v1229 = vld [vmem:[%s1203] ss:$9 sm:$0xff]
      %v1230 = vld [vmem:[%s1205] ss:$9 sm:$0xff]
      %v1256 = vld [vmem:[%s6 + $0x1] sm:$0x1]
      %v1257 = vperm.slane %v1256, 0
      %v1259 = vrot.slane %v1257, 1
      %v1260 = vrot.slane %v1257, 2
      %v1261 = vrot.slane %v1257, 3
      %v1262 = vrot.slane %v1257, 4
      %v1263 = vrot.slane %v1257, 5
      %v1264 = vrot.slane %v1257, 6
      %v1265 = vrot.slane %v1257, 7
      %v1273 = vmul.f32 %v1198, %v1257
      %v1274 = vmul.f32 %v1200, %v1259
      %v1275 = vmul.f32 %v1202, %v1260
      %v1276 = vmul.f32 %v1204, %v1261
      %v1277 = vmul.f32 %v1206, %v1262
      %v1278 = vmul.f32 %v1208, %v1263
      %v1279 = vmul.f32 %v1209, %v1264
      %v1280 = vmul.f32 %v1210, %v1265
      %v1281 = vmul.f32 %v1211, %v1257
      %v1282 = vmul.f32 %v1212, %v1259
      %v1283 = vmul.f32 %v1214, %v1260
      %v1284 = vmul.f32 %v1215, %v1261
      %v1285 = vmul.f32 %v1216, %v1262
      %v1286 = vmul.f32 %v1217, %v1263
      %v1287 = vmul.f32 %v1218, %v1264
      %v1288 = vmul.f32 %v1220, %v1265
      %v1289 = vmul.f32 %v1221, %v1257
      %v1290 = vmul.f32 %v1222, %v1259
      %v1291 = vmul.f32 %v1223, %v1260
      %v1292 = vmul.f32 %v1224, %v1261
      %v1293 = vmul.f32 %v1226, %v1262
      %v1294 = vmul.f32 %v1227, %v1263
      %v1295 = vmul.f32 %v1228, %v1264
      %v1296 = vmul.f32 %v1229, %v1265
      %v1297 = vmul.f32 %v1230, %v1257
      %v1298 = vadd.f32 %v1171, %v1273
      %v1299 = vadd.f32 %v1172, %v1274
      %v1300 = vadd.f32 %v1173, %v1275
      %v1301 = vadd.f32 %v1174, %v1276
      %v1302 = vadd.f32 %v1175, %v1277
      %v1303 = vadd.f32 %v1176, %v1278
      %v1304 = vadd.f32 %v1177, %v1279
      %v1305 = vadd.f32 %v1178, %v1280
      %v1306 = vadd.f32 %v1179, %v1281
      %v1307 = vadd.f32 %v1180, %v1282
      %v1308 = vadd.f32 %v1181, %v1283
      %v1309 = vadd.f32 %v1182, %v1284
      %v1310 = vadd.f32 %v1183, %v1285
      %v1311 = vadd.f32 %v1184, %v1286
      %v1312 = vadd.f32 %v1185, %v1287
      %v1313 = vadd.f32 %v1186, %v1288
      %v1314 = vadd.f32 %v1187, %v1289
      %v1315 = vadd.f32 %v1188, %v1290
      %v1316 = vadd.f32 %v1189, %v1291
      %v1317 = vadd.f32 %v1190, %v1292
      %v1318 = vadd.f32 %v1191, %v1293
      %v1319 = vadd.f32 %v1192, %v1294
      %v1320 = vadd.f32 %v1193, %v1295
      %v1321 = vadd.f32 %v1194, %v1296
      %v1322 = vadd.f32 %v1195, %v1297
      %1323 = vst [vmem:[#allocation1] sm:$0xff] %v1076
      %s1324 = scalar_lea.vmem [#allocation1], 2
      %v1325 = vld [vmem:[%s1324] ss:$9 sm:$0xff]
      %s1326 = scalar_lea.vmem [#allocation1], 3
      %v1327 = vld [vmem:[%s1326] ss:$9 sm:$0xff]
      %s1328 = scalar_lea.vmem [#allocation1], 4
      %v1329 = vld [vmem:[%s1328] ss:$9 sm:$0xff]
      %s1330 = scalar_lea.vmem [#allocation1], 5
      %v1331 = vld [vmem:[%s1330] ss:$9 sm:$0xff]
      %s1332 = scalar_lea.vmem [#allocation1], 6
      %v1333 = vld [vmem:[%s1332] ss:$9 sm:$0xff]
      %1334 = vst [vmem:[#allocation1] sm:$0xff] %v1077
      %v1335 = vld [vmem:[%s1324] ss:$9 sm:$0xff]
      %v1336 = vld [vmem:[%s1326] ss:$9 sm:$0xff]
      %v1337 = vld [vmem:[%s1328] ss:$9 sm:$0xff]
      %v1338 = vld [vmem:[%s1330] ss:$9 sm:$0xff]
      %v1339 = vld [vmem:[%s1332] ss:$9 sm:$0xff]
      %1340 = vst [vmem:[#allocation1] sm:$0xff] %v1078
      %v1341 = vld [vmem:[%s1324] ss:$9 sm:$0xff]
      %v1342 = vld [vmem:[%s1326] ss:$9 sm:$0xff]
      %v1343 = vld [vmem:[%s1328] ss:$9 sm:$0xff]
      %v1344 = vld [vmem:[%s1330] ss:$9 sm:$0xff]
      %v1345 = vld [vmem:[%s1332] ss:$9 sm:$0xff]
      %1346 = vst [vmem:[#allocation1] sm:$0xff] %v1079
      %v1347 = vld [vmem:[%s1324] ss:$9 sm:$0xff]
      %v1348 = vld [vmem:[%s1326] ss:$9 sm:$0xff]
      %v1349 = vld [vmem:[%s1328] ss:$9 sm:$0xff]
      %v1350 = vld [vmem:[%s1330] ss:$9 sm:$0xff]
      %v1351 = vld [vmem:[%s1332] ss:$9 sm:$0xff]
      %1352 = vst [vmem:[#allocation1] sm:$0xff] %v1080
      %v1353 = vld [vmem:[%s1324] ss:$9 sm:$0xff]
      %v1354 = vld [vmem:[%s1326] ss:$9 sm:$0xff]
      %v1355 = vld [vmem:[%s1328] ss:$9 sm:$0xff]
      %v1356 = vld [vmem:[%s1330] ss:$9 sm:$0xff]
      %v1357 = vld [vmem:[%s1332] ss:$9 sm:$0xff]
      %v1383 = vld [vmem:[%s6 + $0x2] sm:$0x1]
      %v1384 = vperm.slane %v1383, 0
      %v1386 = vrot.slane %v1384, 1
      %v1387 = vrot.slane %v1384, 2
      %v1388 = vrot.slane %v1384, 3
      %v1389 = vrot.slane %v1384, 4
      %v1390 = vrot.slane %v1384, 5
      %v1391 = vrot.slane %v1384, 6
      %v1392 = vrot.slane %v1384, 7
      %v1400 = vmul.f32 %v1325, %v1384
      %v1401 = vmul.f32 %v1327, %v1386
      %v1402 = vmul.f32 %v1329, %v1387
      %v1403 = vmul.f32 %v1331, %v1388
      %v1404 = vmul.f32 %v1333, %v1389
      %v1405 = vmul.f32 %v1335, %v1390
      %v1406 = vmul.f32 %v1336, %v1391
      %v1407 = vmul.f32 %v1337, %v1392
      %v1408 = vmul.f32 %v1338, %v1384
      %v1409 = vmul.f32 %v1339, %v1386
      %v1410 = vmul.f32 %v1341, %v1387
      %v1411 = vmul.f32 %v1342, %v1388
      %v1412 = vmul.f32 %v1343, %v1389
      %v1413 = vmul.f32 %v1344, %v1390
      %v1414 = vmul.f32 %v1345, %v1391
      %v1415 = vmul.f32 %v1347, %v1392
      %v1416 = vmul.f32 %v1348, %v1384
      %v1417 = vmul.f32 %v1349, %v1386
      %v1418 = vmul.f32 %v1350, %v1387
      %v1419 = vmul.f32 %v1351, %v1388
      %v1420 = vmul.f32 %v1353, %v1389
      %v1421 = vmul.f32 %v1354, %v1390
      %v1422 = vmul.f32 %v1355, %v1391
      %v1423 = vmul.f32 %v1356, %v1392
      %v1424 = vmul.f32 %v1357, %v1384
      %v1425 = vadd.f32 %v1298, %v1400
      %v1426 = vadd.f32 %v1299, %v1401
      %v1427 = vadd.f32 %v1300, %v1402
      %v1428 = vadd.f32 %v1301, %v1403
      %v1429 = vadd.f32 %v1302, %v1404
      %v1430 = vadd.f32 %v1303, %v1405
      %v1431 = vadd.f32 %v1304, %v1406
      %v1432 = vadd.f32 %v1305, %v1407
      %v1433 = vadd.f32 %v1306, %v1408
      %v1434 = vadd.f32 %v1307, %v1409
      %v1435 = vadd.f32 %v1308, %v1410
      %v1436 = vadd.f32 %v1309, %v1411
      %v1437 = vadd.f32 %v1310, %v1412
      %v1438 = vadd.f32 %v1311, %v1413
      %v1439 = vadd.f32 %v1312, %v1414
      %v1440 = vadd.f32 %v1313, %v1415
      %v1441 = vadd.f32 %v1314, %v1416
      %v1442 = vadd.f32 %v1315, %v1417
      %v1443 = vadd.f32 %v1316, %v1418
      %v1444 = vadd.f32 %v1317, %v1419
      %v1445 = vadd.f32 %v1318, %v1420
      %v1446 = vadd.f32 %v1319, %v1421
      %v1447 = vadd.f32 %v1320, %v1422
      %v1448 = vadd.f32 %v1321, %v1423
      %v1449 = vadd.f32 %v1322, %v1424
      %1450 = vst [vmem:[#allocation1] sm:$0xff] %v1076
      %s1451 = scalar_lea.vmem [#allocation1], 3
      %v1452 = vld [vmem:[%s1451] ss:$9 sm:$0xff]
      %s1453 = scalar_lea.vmem [#allocation1], 4
      %v1454 = vld [vmem:[%s1453] ss:$9 sm:$0xff]
      %s1455 = scalar_lea.vmem [#allocation1], 5
      %v1456 = vld [vmem:[%s1455] ss:$9 sm:$0xff]
      %s1457 = scalar_lea.vmem [#allocation1], 6
      %v1458 = vld [vmem:[%s1457] ss:$9 sm:$0xff]
      %s1459 = scalar_lea.vmem [#allocation1], 7
      %v1460 = vld [vmem:[%s1459] ss:$9 sm:$0xff]
      %1461 = vst [vmem:[#allocation1] sm:$0xff] %v1077
      %v1462 = vld [vmem:[%s1451] ss:$9 sm:$0xff]
      %v1463 = vld [vmem:[%s1453] ss:$9 sm:$0xff]
      %v1464 = vld [vmem:[%s1455] ss:$9 sm:$0xff]
      %v1465 = vld [vmem:[%s1457] ss:$9 sm:$0xff]
      %v1466 = vld [vmem:[%s1459] ss:$9 sm:$0xff]
      %1467 = vst [vmem:[#allocation1] sm:$0xff] %v1078
      %v1468 = vld [vmem:[%s1451] ss:$9 sm:$0xff]
      %v1469 = vld [vmem:[%s1453] ss:$9 sm:$0xff]
      %v1470 = vld [vmem:[%s1455] ss:$9 sm:$0xff]
      %v1471 = vld [vmem:[%s1457] ss:$9 sm:$0xff]
      %v1472 = vld [vmem:[%s1459] ss:$9 sm:$0xff]
      %1473 = vst [vmem:[#allocation1] sm:$0xff] %v1079
      %v1474 = vld [vmem:[%s1451] ss:$9 sm:$0xff]
      %v1475 = vld [vmem:[%s1453] ss:$9 sm:$0xff]
      %v1476 = vld [vmem:[%s1455] ss:$9 sm:$0xff]
      %v1477 = vld [vmem:[%s1457] ss:$9 sm:$0xff]
      %v1478 = vld [vmem:[%s1459] ss:$9 sm:$0xff]
      %1479 = vst [vmem:[#allocation1] sm:$0xff] %v1080
      %v1480 = vld [vmem:[%s1451] ss:$9 sm:$0xff]
      %v1481 = vld [vmem:[%s1453] ss:$9 sm:$0xff]
      %v1482 = vld [vmem:[%s1455] ss:$9 sm:$0xff]
      %v1483 = vld [vmem:[%s1457] ss:$9 sm:$0xff]
      %v1484 = vld [vmem:[%s1459] ss:$9 sm:$0xff]
      %v1510 = vld [vmem:[%s6 + $0x3] sm:$0x1]
      %v1511 = vperm.slane %v1510, 0
      %v1513 = vrot.slane %v1511, 1
      %v1514 = vrot.slane %v1511, 2
      %v1515 = vrot.slane %v1511, 3
      %v1516 = vrot.slane %v1511, 4
      %v1517 = vrot.slane %v1511, 5
      %v1518 = vrot.slane %v1511, 6
      %v1519 = vrot.slane %v1511, 7
      %v1527 = vmul.f32 %v1452, %v1511
      %v1528 = vmul.f32 %v1454, %v1513
      %v1529 = vmul.f32 %v1456, %v1514
      %v1530 = vmul.f32 %v1458, %v1515
      %v1531 = vmul.f32 %v1460, %v1516
      %v1532 = vmul.f32 %v1462, %v1517
      %v1533 = vmul.f32 %v1463, %v1518
      %v1534 = vmul.f32 %v1464, %v1519
      %v1535 = vmul.f32 %v1465, %v1511
      %v1536 = vmul.f32 %v1466, %v1513
      %v1537 = vmul.f32 %v1468, %v1514
      %v1538 = vmul.f32 %v1469, %v1515
      %v1539 = vmul.f32 %v1470, %v1516
      %v1540 = vmul.f32 %v1471, %v1517
      %v1541 = vmul.f32 %v1472, %v1518
      %v1542 = vmul.f32 %v1474, %v1519
      %v1543 = vmul.f32 %v1475, %v1511
      %v1544 = vmul.f32 %v1476, %v1513
      %v1545 = vmul.f32 %v1477, %v1514
      %v1546 = vmul.f32 %v1478, %v1515
      %v1547 = vmul.f32 %v1480, %v1516
      %v1548 = vmul.f32 %v1481, %v1517
      %v1549 = vmul.f32 %v1482, %v1518
      %v1550 = vmul.f32 %v1483, %v1519
      %v1551 = vmul.f32 %v1484, %v1511
      %v1552 = vadd.f32 %v1425, %v1527
      %v1553 = vadd.f32 %v1426, %v1528
      %v1554 = vadd.f32 %v1427, %v1529
      %v1555 = vadd.f32 %v1428, %v1530
      %v1556 = vadd.f32 %v1429, %v1531
      %v1557 = vadd.f32 %v1430, %v1532
      %v1558 = vadd.f32 %v1431, %v1533
      %v1559 = vadd.f32 %v1432, %v1534
      %v1560 = vadd.f32 %v1433, %v1535
      %v1561 = vadd.f32 %v1434, %v1536
      %v1562 = vadd.f32 %v1435, %v1537
      %v1563 = vadd.f32 %v1436, %v1538
      %v1564 = vadd.f32 %v1437, %v1539
      %v1565 = vadd.f32 %v1438, %v1540
      %v1566 = vadd.f32 %v1439, %v1541
      %v1567 = vadd.f32 %v1440, %v1542
      %v1568 = vadd.f32 %v1441, %v1543
      %v1569 = vadd.f32 %v1442, %v1544
      %v1570 = vadd.f32 %v1443, %v1545
      %v1571 = vadd.f32 %v1444, %v1546
      %v1572 = vadd.f32 %v1445, %v1547
      %v1573 = vadd.f32 %v1446, %v1548
      %v1574 = vadd.f32 %v1447, %v1549
      %v1575 = vadd.f32 %v1448, %v1550
      %v1576 = vadd.f32 %v1449, %v1551
      %v1578 = vrot.slane %v1081, 1
      %v1579 = vrot.slane %v1081, 2
      %v1580 = vrot.slane %v1081, 3
      %v1581 = vrot.slane %v1081, 4
      %v1586 = vld [vmem:[%s6 + $0x4] sm:$0x1]
      %v1587 = vperm.slane %v1586, 0
      %v1589 = vrot.slane %v1587, 1
      %v1590 = vrot.slane %v1587, 2
      %v1591 = vrot.slane %v1587, 3
      %v1592 = vrot.slane %v1587, 4
      %v1593 = vrot.slane %v1587, 5
      %v1594 = vrot.slane %v1587, 6
      %v1595 = vrot.slane %v1587, 7
      %v1603 = vmul.f32 %v1077, %v1587
      %v1604 = vmul.f32 %v1093, %v1589
      %v1605 = vmul.f32 %v1094, %v1590
      %v1606 = vmul.f32 %v1095, %v1591
      %v1607 = vmul.f32 %v1096, %v1592
      %v1608 = vmul.f32 %v1078, %v1593
      %v1609 = vmul.f32 %v1097, %v1594
      %v1610 = vmul.f32 %v1098, %v1595
      %v1611 = vmul.f32 %v1099, %v1587
      %v1612 = vmul.f32 %v1100, %v1589
      %v1613 = vmul.f32 %v1079, %v1590
      %v1614 = vmul.f32 %v1101, %v1591
      %v1615 = vmul.f32 %v1102, %v1592
      %v1616 = vmul.f32 %v1103, %v1593
      %v1617 = vmul.f32 %v1104, %v1594
      %v1618 = vmul.f32 %v1080, %v1595
      %v1619 = vmul.f32 %v1105, %v1587
      %v1620 = vmul.f32 %v1106, %v1589
      %v1621 = vmul.f32 %v1107, %v1590
      %v1622 = vmul.f32 %v1108, %v1591
      %v1623 = vmul.f32 %v1081, %v1592
      %v1624 = vmul.f32 %v1578, %v1593
      %v1625 = vmul.f32 %v1579, %v1594
      %v1626 = vmul.f32 %v1580, %v1595
      %v1627 = vmul.f32 %v1581, %v1587
      %v1628 = vadd.f32 %v1552, %v1603
      %v1629 = vadd.f32 %v1553, %v1604
      %v1630 = vadd.f32 %v1554, %v1605
      %v1631 = vadd.f32 %v1555, %v1606
      %v1632 = vadd.f32 %v1556, %v1607
      %v1633 = vadd.f32 %v1557, %v1608
      %v1634 = vadd.f32 %v1558, %v1609
      %v1635 = vadd.f32 %v1559, %v1610
      %v1636 = vadd.f32 %v1560, %v1611
      %v1637 = vadd.f32 %v1561, %v1612
      %v1638 = vadd.f32 %v1562, %v1613
      %v1639 = vadd.f32 %v1563, %v1614
      %v1640 = vadd.f32 %v1564, %v1615
      %v1641 = vadd.f32 %v1565, %v1616
      %v1642 = vadd.f32 %v1566, %v1617
      %v1643 = vadd.f32 %v1567, %v1618
      %v1644 = vadd.f32 %v1568, %v1619
      %v1645 = vadd.f32 %v1569, %v1620
      %v1646 = vadd.f32 %v1570, %v1621
      %v1647 = vadd.f32 %v1571, %v1622
      %v1648 = vadd.f32 %v1572, %v1623
      %v1649 = vadd.f32 %v1573, %v1624
      %v1650 = vadd.f32 %v1574, %v1625
      %v1651 = vadd.f32 %v1575, %v1626
      %v1652 = vadd.f32 %v1576, %v1627
      %1653 = vst [vmem:[#allocation1] sm:$0xff] %v1077
      %s1654 = scalar_lea.vmem [#allocation1], 1
      %v1655 = vld [vmem:[%s1654] ss:$9 sm:$0xff]
      %s1656 = scalar_lea.vmem [#allocation1], 2
      %v1657 = vld [vmem:[%s1656] ss:$9 sm:$0xff]
      %s1658 = scalar_lea.vmem [#allocation1], 3
      %v1659 = vld [vmem:[%s1658] ss:$9 sm:$0xff]
      %s1660 = scalar_lea.vmem [#allocation1], 4
      %v1661 = vld [vmem:[%s1660] ss:$9 sm:$0xff]
      %s1662 = scalar_lea.vmem [#allocation1], 5
      %v1663 = vld [vmem:[%s1662] ss:$9 sm:$0xff]
      %1664 = vst [vmem:[#allocation1] sm:$0xff] %v1078
      %v1665 = vld [vmem:[%s1654] ss:$9 sm:$0xff]
      %v1666 = vld [vmem:[%s1656] ss:$9 sm:$0xff]
      %v1667 = vld [vmem:[%s1658] ss:$9 sm:$0xff]
      %v1668 = vld [vmem:[%s1660] ss:$9 sm:$0xff]
      %v1669 = vld [vmem:[%s1662] ss:$9 sm:$0xff]
      %1670 = vst [vmem:[#allocation1] sm:$0xff] %v1079
      %v1671 = vld [vmem:[%s1654] ss:$9 sm:$0xff]
      %v1672 = vld [vmem:[%s1656] ss:$9 sm:$0xff]
      %v1673 = vld [vmem:[%s1658] ss:$9 sm:$0xff]
      %v1674 = vld [vmem:[%s1660] ss:$9 sm:$0xff]
      %v1675 = vld [vmem:[%s1662] ss:$9 sm:$0xff]
      %1676 = vst [vmem:[#allocation1] sm:$0xff] %v1080
      %v1677 = vld [vmem:[%s1654] ss:$9 sm:$0xff]
      %v1678 = vld [vmem:[%s1656] ss:$9 sm:$0xff]
      %v1679 = vld [vmem:[%s1658] ss:$9 sm:$0xff]
      %v1680 = vld [vmem:[%s1660] ss:$9 sm:$0xff]
      %v1681 = vld [vmem:[%s1662] ss:$9 sm:$0xff]
      %1682 = vst [vmem:[#allocation1] sm:$0xff] %v1081
      %v1683 = vld [vmem:[%s1654] ss:$9 sm:$0xff]
      %v1684 = vld [vmem:[%s1656] ss:$9 sm:$0xff]
      %v1685 = vld [vmem:[%s1658] ss:$9 sm:$0xff]
      %v1686 = vld [vmem:[%s1660] ss:$9 sm:$0xff]
      %v1687 = vld [vmem:[%s1662] ss:$9 sm:$0xff]
      %v1713 = vld [vmem:[%s6 + $0x5] sm:$0x1]
      %v1714 = vperm.slane %v1713, 0
      %v1716 = vrot.slane %v1714, 1
      %v1717 = vrot.slane %v1714, 2
      %v1718 = vrot.slane %v1714, 3
      %v1719 = vrot.slane %v1714, 4
      %v1720 = vrot.slane %v1714, 5
      %v1721 = vrot.slane %v1714, 6
      %v1722 = vrot.slane %v1714, 7
      %v1730 = vmul.f32 %v1655, %v1714
      %v1731 = vmul.f32 %v1657, %v1716
      %v1732 = vmul.f32 %v1659, %v1717
      %v1733 = vmul.f32 %v1661, %v1718
      %v1734 = vmul.f32 %v1663, %v1719
      %v1735 = vmul.f32 %v1665, %v1720
      %v1736 = vmul.f32 %v1666, %v1721
      %v1737 = vmul.f32 %v1667, %v1722
      %v1738 = vmul.f32 %v1668, %v1714
      %v1739 = vmul.f32 %v1669, %v1716
      %v1740 = vmul.f32 %v1671, %v1717
      %v1741 = vmul.f32 %v1672, %v1718
      %v1742 = vmul.f32 %v1673, %v1719
      %v1743 = vmul.f32 %v1674, %v1720
      %v1744 = vmul.f32 %v1675, %v1721
      %v1745 = vmul.f32 %v1677, %v1722
      %v1746 = vmul.f32 %v1678, %v1714
      %v1747 = vmul.f32 %v1679, %v1716
      %v1748 = vmul.f32 %v1680, %v1717
      %v1749 = vmul.f32 %v1681, %v1718
      %v1750 = vmul.f32 %v1683, %v1719
      %v1751 = vmul.f32 %v1684, %v1720
      %v1752 = vmul.f32 %v1685, %v1721
      %v1753 = vmul.f32 %v1686, %v1722
      %v1754 = vmul.f32 %v1687, %v1714
      %v1755 = vadd.f32 %v1628, %v1730
      %v1756 = vadd.f32 %v1629, %v1731
      %v1757 = vadd.f32 %v1630, %v1732
      %v1758 = vadd.f32 %v1631, %v1733
      %v1759 = vadd.f32 %v1632, %v1734
      %v1760 = vadd.f32 %v1633, %v1735
      %v1761 = vadd.f32 %v1634, %v1736
      %v1762 = vadd.f32 %v1635, %v1737
      %v1763 = vadd.f32 %v1636, %v1738
      %v1764 = vadd.f32 %v1637, %v1739
      %v1765 = vadd.f32 %v1638, %v1740
      %v1766 = vadd.f32 %v1639, %v1741
      %v1767 = vadd.f32 %v1640, %v1742
      %v1768 = vadd.f32 %v1641, %v1743
      %v1769 = vadd.f32 %v1642, %v1744
      %v1770 = vadd.f32 %v1643, %v1745
      %v1771 = vadd.f32 %v1644, %v1746
      %v1772 = vadd.f32 %v1645, %v1747
      %v1773 = vadd.f32 %v1646, %v1748
      %v1774 = vadd.f32 %v1647, %v1749
      %v1775 = vadd.f32 %v1648, %v1750
      %v1776 = vadd.f32 %v1649, %v1751
      %v1777 = vadd.f32 %v1650, %v1752
      %v1778 = vadd.f32 %v1651, %v1753
      %v1779 = vadd.f32 %v1652, %v1754
      %1780 = vst [vmem:[#allocation1] sm:$0xff] %v1077
      %s1781 = scalar_lea.vmem [#allocation1], 2
      %v1782 = vld [vmem:[%s1781] ss:$9 sm:$0xff]
      %s1783 = scalar_lea.vmem [#allocation1], 3
      %v1784 = vld [vmem:[%s1783] ss:$9 sm:$0xff]
      %s1785 = scalar_lea.vmem [#allocation1], 4
      %v1786 = vld [vmem:[%s1785] ss:$9 sm:$0xff]
      %s1787 = scalar_lea.vmem [#allocation1], 5
      %v1788 = vld [vmem:[%s1787] ss:$9 sm:$0xff]
      %s1789 = scalar_lea.vmem [#allocation1], 6
      %v1790 = vld [vmem:[%s1789] ss:$9 sm:$0xff]
      %1791 = vst [vmem:[#allocation1] sm:$0xff] %v1078
      %v1792 = vld [vmem:[%s1781] ss:$9 sm:$0xff]
      %v1793 = vld [vmem:[%s1783] ss:$9 sm:$0xff]
      %v1794 = vld [vmem:[%s1785] ss:$9 sm:$0xff]
      %v1795 = vld [vmem:[%s1787] ss:$9 sm:$0xff]
      %v1796 = vld [vmem:[%s1789] ss:$9 sm:$0xff]
      %1797 = vst [vmem:[#allocation1] sm:$0xff] %v1079
      %v1798 = vld [vmem:[%s1781] ss:$9 sm:$0xff]
      %v1799 = vld [vmem:[%s1783] ss:$9 sm:$0xff]
      %v1800 = vld [vmem:[%s1785] ss:$9 sm:$0xff]
      %v1801 = vld [vmem:[%s1787] ss:$9 sm:$0xff]
      %v1802 = vld [vmem:[%s1789] ss:$9 sm:$0xff]
      %1803 = vst [vmem:[#allocation1] sm:$0xff] %v1080
      %v1804 = vld [vmem:[%s1781] ss:$9 sm:$0xff]
      %v1805 = vld [vmem:[%s1783] ss:$9 sm:$0xff]
      %v1806 = vld [vmem:[%s1785] ss:$9 sm:$0xff]
      %v1807 = vld [vmem:[%s1787] ss:$9 sm:$0xff]
      %v1808 = vld [vmem:[%s1789] ss:$9 sm:$0xff]
      %1809 = vst [vmem:[#allocation1] sm:$0xff] %v1081
      %v1810 = vld [vmem:[%s1781] ss:$9 sm:$0xff]
      %v1811 = vld [vmem:[%s1783] ss:$9 sm:$0xff]
      %v1812 = vld [vmem:[%s1785] ss:$9 sm:$0xff]
      %v1813 = vld [vmem:[%s1787] ss:$9 sm:$0xff]
      %v1814 = vld [vmem:[%s1789] ss:$9 sm:$0xff]
      %v1840 = vld [vmem:[%s6 + $0x6] sm:$0x1]
      %v1841 = vperm.slane %v1840, 0
      %v1843 = vrot.slane %v1841, 1
      %v1844 = vrot.slane %v1841, 2
      %v1845 = vrot.slane %v1841, 3
      %v1846 = vrot.slane %v1841, 4
      %v1847 = vrot.slane %v1841, 5
      %v1848 = vrot.slane %v1841, 6
      %v1849 = vrot.slane %v1841, 7
      %v1857 = vmul.f32 %v1782, %v1841
      %v1858 = vmul.f32 %v1784, %v1843
      %v1859 = vmul.f32 %v1786, %v1844
      %v1860 = vmul.f32 %v1788, %v1845
      %v1861 = vmul.f32 %v1790, %v1846
      %v1862 = vmul.f32 %v1792, %v1847
      %v1863 = vmul.f32 %v1793, %v1848
      %v1864 = vmul.f32 %v1794, %v1849
      %v1865 = vmul.f32 %v1795, %v1841
      %v1866 = vmul.f32 %v1796, %v1843
      %v1867 = vmul.f32 %v1798, %v1844
      %v1868 = vmul.f32 %v1799, %v1845
      %v1869 = vmul.f32 %v1800, %v1846
      %v1870 = vmul.f32 %v1801, %v1847
      %v1871 = vmul.f32 %v1802, %v1848
      %v1872 = vmul.f32 %v1804, %v1849
      %v1873 = vmul.f32 %v1805, %v1841
      %v1874 = vmul.f32 %v1806, %v1843
      %v1875 = vmul.f32 %v1807, %v1844
      %v1876 = vmul.f32 %v1808, %v1845
      %v1877 = vmul.f32 %v1810, %v1846
      %v1878 = vmul.f32 %v1811, %v1847
      %v1879 = vmul.f32 %v1812, %v1848
      %v1880 = vmul.f32 %v1813, %v1849
      %v1881 = vmul.f32 %v1814, %v1841
      %v1882 = vadd.f32 %v1755, %v1857
      %v1883 = vadd.f32 %v1756, %v1858
      %v1884 = vadd.f32 %v1757, %v1859
      %v1885 = vadd.f32 %v1758, %v1860
      %v1886 = vadd.f32 %v1759, %v1861
      %v1887 = vadd.f32 %v1760, %v1862
      %v1888 = vadd.f32 %v1761, %v1863
      %v1889 = vadd.f32 %v1762, %v1864
      %v1890 = vadd.f32 %v1763, %v1865
      %v1891 = vadd.f32 %v1764, %v1866
      %v1892 = vadd.f32 %v1765, %v1867
      %v1893 = vadd.f32 %v1766, %v1868
      %v1894 = vadd.f32 %v1767, %v1869
      %v1895 = vadd.f32 %v1768, %v1870
      %v1896 = vadd.f32 %v1769, %v1871
      %v1897 = vadd.f32 %v1770, %v1872
      %v1898 = vadd.f32 %v1771, %v1873
      %v1899 = vadd.f32 %v1772, %v1874
      %v1900 = vadd.f32 %v1773, %v1875
      %v1901 = vadd.f32 %v1774, %v1876
      %v1902 = vadd.f32 %v1775, %v1877
      %v1903 = vadd.f32 %v1776, %v1878
      %v1904 = vadd.f32 %v1777, %v1879
      %v1905 = vadd.f32 %v1778, %v1880
      %v1906 = vadd.f32 %v1779, %v1881
      %1907 = vst [vmem:[#allocation1] sm:$0xff] %v1077
      %s1908 = scalar_lea.vmem [#allocation1], 3
      %v1909 = vld [vmem:[%s1908] ss:$9 sm:$0xff]
      %s1910 = scalar_lea.vmem [#allocation1], 4
      %v1911 = vld [vmem:[%s1910] ss:$9 sm:$0xff]
      %s1912 = scalar_lea.vmem [#allocation1], 5
      %v1913 = vld [vmem:[%s1912] ss:$9 sm:$0xff]
      %s1914 = scalar_lea.vmem [#allocation1], 6
      %v1915 = vld [vmem:[%s1914] ss:$9 sm:$0xff]
      %s1916 = scalar_lea.vmem [#allocation1], 7
      %v1917 = vld [vmem:[%s1916] ss:$9 sm:$0xff]
      %1918 = vst [vmem:[#allocation1] sm:$0xff] %v1078
      %v1919 = vld [vmem:[%s1908] ss:$9 sm:$0xff]
      %v1920 = vld [vmem:[%s1910] ss:$9 sm:$0xff]
      %v1921 = vld [vmem:[%s1912] ss:$9 sm:$0xff]
      %v1922 = vld [vmem:[%s1914] ss:$9 sm:$0xff]
      %v1923 = vld [vmem:[%s1916] ss:$9 sm:$0xff]
      %1924 = vst [vmem:[#allocation1] sm:$0xff] %v1079
      %v1925 = vld [vmem:[%s1908] ss:$9 sm:$0xff]
      %v1926 = vld [vmem:[%s1910] ss:$9 sm:$0xff]
      %v1927 = vld [vmem:[%s1912] ss:$9 sm:$0xff]
      %v1928 = vld [vmem:[%s1914] ss:$9 sm:$0xff]
      %v1929 = vld [vmem:[%s1916] ss:$9 sm:$0xff]
      %1930 = vst [vmem:[#allocation1] sm:$0xff] %v1080
      %v1931 = vld [vmem:[%s1908] ss:$9 sm:$0xff]
      %v1932 = vld [vmem:[%s1910] ss:$9 sm:$0xff]
      %v1933 = vld [vmem:[%s1912] ss:$9 sm:$0xff]
      %v1934 = vld [vmem:[%s1914] ss:$9 sm:$0xff]
      %v1935 = vld [vmem:[%s1916] ss:$9 sm:$0xff]
      %1936 = vst [vmem:[#allocation1] sm:$0xff] %v1081
      %v1937 = vld [vmem:[%s1908] ss:$9 sm:$0xff]
      %v1938 = vld [vmem:[%s1910] ss:$9 sm:$0xff]
      %v1939 = vld [vmem:[%s1912] ss:$9 sm:$0xff]
      %v1940 = vld [vmem:[%s1914] ss:$9 sm:$0xff]
      %v1941 = vld [vmem:[%s1916] ss:$9 sm:$0xff]
      %v1967 = vld [vmem:[%s6 + $0x7] sm:$0x1]
      %v1968 = vperm.slane %v1967, 0
      %v1970 = vrot.slane %v1968, 1
      %v1971 = vrot.slane %v1968, 2
      %v1972 = vrot.slane %v1968, 3
      %v1973 = vrot.slane %v1968, 4
      %v1974 = vrot.slane %v1968, 5
      %v1975 = vrot.slane %v1968, 6
      %v1976 = vrot.slane %v1968, 7
      %v1984 = vmul.f32 %v1909, %v1968
      %v1985 = vmul.f32 %v1911, %v1970
      %v1986 = vmul.f32 %v1913, %v1971
      %v1987 = vmul.f32 %v1915, %v1972
      %v1988 = vmul.f32 %v1917, %v1973
      %v1989 = vmul.f32 %v1919, %v1974
      %v1990 = vmul.f32 %v1920, %v1975
      %v1991 = vmul.f32 %v1921, %v1976
      %v1992 = vmul.f32 %v1922, %v1968
      %v1993 = vmul.f32 %v1923, %v1970
      %v1994 = vmul.f32 %v1925, %v1971
      %v1995 = vmul.f32 %v1926, %v1972
      %v1996 = vmul.f32 %v1927, %v1973
      %v1997 = vmul.f32 %v1928, %v1974
      %v1998 = vmul.f32 %v1929, %v1975
      %v1999 = vmul.f32 %v1931, %v1976
      %v2000 = vmul.f32 %v1932, %v1968
      %v2001 = vmul.f32 %v1933, %v1970
      %v2002 = vmul.f32 %v1934, %v1971
      %v2003 = vmul.f32 %v1935, %v1972
      %v2004 = vmul.f32 %v1937, %v1973
      %v2005 = vmul.f32 %v1938, %v1974
      %v2006 = vmul.f32 %v1939, %v1975
      %v2007 = vmul.f32 %v1940, %v1976
      %v2008 = vmul.f32 %v1941, %v1968
      %v2009 = vadd.f32 %v1882, %v1984
      %v2010 = vadd.f32 %v1883, %v1985
      %v2011 = vadd.f32 %v1884, %v1986
      %v2012 = vadd.f32 %v1885, %v1987
      %v2013 = vadd.f32 %v1886, %v1988
      %v2014 = vadd.f32 %v1887, %v1989
      %v2015 = vadd.f32 %v1888, %v1990
      %v2016 = vadd.f32 %v1889, %v1991
      %v2017 = vadd.f32 %v1890, %v1992
      %v2018 = vadd.f32 %v1891, %v1993
      %v2019 = vadd.f32 %v1892, %v1994
      %v2020 = vadd.f32 %v1893, %v1995
      %v2021 = vadd.f32 %v1894, %v1996
      %v2022 = vadd.f32 %v1895, %v1997
      %v2023 = vadd.f32 %v1896, %v1998
      %v2024 = vadd.f32 %v1897, %v1999
      %v2025 = vadd.f32 %v1898, %v2000
      %v2026 = vadd.f32 %v1899, %v2001
      %v2027 = vadd.f32 %v1900, %v2002
      %v2028 = vadd.f32 %v1901, %v2003
      %v2029 = vadd.f32 %v1902, %v2004
      %v2030 = vadd.f32 %v1903, %v2005
      %v2031 = vadd.f32 %v1904, %v2006
      %v2032 = vadd.f32 %v1905, %v2007
      %v2033 = vadd.f32 %v1906, %v2008
      %v2035 = vrot.slane %v1082, 1
      %v2036 = vrot.slane %v1082, 2
      %v2037 = vrot.slane %v1082, 3
      %v2038 = vrot.slane %v1082, 4
      %v2043 = vld [vmem:[%s6 + $0x8] sm:$0x1]
      %v2044 = vperm.slane %v2043, 0
      %v2046 = vrot.slane %v2044, 1
      %v2047 = vrot.slane %v2044, 2
      %v2048 = vrot.slane %v2044, 3
      %v2049 = vrot.slane %v2044, 4
      %v2050 = vrot.slane %v2044, 5
      %v2051 = vrot.slane %v2044, 6
      %v2052 = vrot.slane %v2044, 7
      %v2060 = vmul.f32 %v1078, %v2044
      %v2061 = vmul.f32 %v1097, %v2046
      %v2062 = vmul.f32 %v1098, %v2047
      %v2063 = vmul.f32 %v1099, %v2048
      %v2064 = vmul.f32 %v1100, %v2049
      %v2065 = vmul.f32 %v1079, %v2050
      %v2066 = vmul.f32 %v1101, %v2051
      %v2067 = vmul.f32 %v1102, %v2052
      %v2068 = vmul.f32 %v1103, %v2044
      %v2069 = vmul.f32 %v1104, %v2046
      %v2070 = vmul.f32 %v1080, %v2047
      %v2071 = vmul.f32 %v1105, %v2048
      %v2072 = vmul.f32 %v1106, %v2049
      %v2073 = vmul.f32 %v1107, %v2050
      %v2074 = vmul.f32 %v1108, %v2051
      %v2075 = vmul.f32 %v1081, %v2052
      %v2076 = vmul.f32 %v1578, %v2044
      %v2077 = vmul.f32 %v1579, %v2046
      %v2078 = vmul.f32 %v1580, %v2047
      %v2079 = vmul.f32 %v1581, %v2048
      %v2080 = vmul.f32 %v1082, %v2049
      %v2081 = vmul.f32 %v2035, %v2050
      %v2082 = vmul.f32 %v2036, %v2051
      %v2083 = vmul.f32 %v2037, %v2052
      %v2084 = vmul.f32 %v2038, %v2044
      %v2085 = vadd.f32 %v2009, %v2060
      %v2086 = vadd.f32 %v2010, %v2061
      %v2087 = vadd.f32 %v2011, %v2062
      %v2088 = vadd.f32 %v2012, %v2063
      %v2089 = vadd.f32 %v2013, %v2064
      %v2090 = vadd.f32 %v2014, %v2065
      %v2091 = vadd.f32 %v2015, %v2066
      %v2092 = vadd.f32 %v2016, %v2067
      %v2093 = vadd.f32 %v2017, %v2068
      %v2094 = vadd.f32 %v2018, %v2069
      %v2095 = vadd.f32 %v2019, %v2070
      %v2096 = vadd.f32 %v2020, %v2071
      %v2097 = vadd.f32 %v2021, %v2072
      %v2098 = vadd.f32 %v2022, %v2073
      %v2099 = vadd.f32 %v2023, %v2074
      %v2100 = vadd.f32 %v2024, %v2075
      %v2101 = vadd.f32 %v2025, %v2076
      %v2102 = vadd.f32 %v2026, %v2077
      %v2103 = vadd.f32 %v2027, %v2078
      %v2104 = vadd.f32 %v2028, %v2079
      %v2105 = vadd.f32 %v2029, %v2080
      %v2106 = vadd.f32 %v2030, %v2081
      %v2107 = vadd.f32 %v2031, %v2082
      %v2108 = vadd.f32 %v2032, %v2083
      %v2109 = vadd.f32 %v2033, %v2084
      %2110 = vst [vmem:[#allocation1] sm:$0xff] %v1078
      %s2111 = scalar_lea.vmem [#allocation1], 1
      %v2112 = vld [vmem:[%s2111] ss:$9 sm:$0xff]
      %s2113 = scalar_lea.vmem [#allocation1], 2
      %v2114 = vld [vmem:[%s2113] ss:$9 sm:$0xff]
      %s2115 = scalar_lea.vmem [#allocation1], 3
      %v2116 = vld [vmem:[%s2115] ss:$9 sm:$0xff]
      %s2117 = scalar_lea.vmem [#allocation1], 4
      %v2118 = vld [vmem:[%s2117] ss:$9 sm:$0xff]
      %s2119 = scalar_lea.vmem [#allocation1], 5
      %v2120 = vld [vmem:[%s2119] ss:$9 sm:$0xff]
      %2121 = vst [vmem:[#allocation1] sm:$0xff] %v1079
      %v2122 = vld [vmem:[%s2111] ss:$9 sm:$0xff]
      %v2123 = vld [vmem:[%s2113] ss:$9 sm:$0xff]
      %v2124 = vld [vmem:[%s2115] ss:$9 sm:$0xff]
      %v2125 = vld [vmem:[%s2117] ss:$9 sm:$0xff]
      %v2126 = vld [vmem:[%s2119] ss:$9 sm:$0xff]
      %2127 = vst [vmem:[#allocation1] sm:$0xff] %v1080
      %v2128 = vld [vmem:[%s2111] ss:$9 sm:$0xff]
      %v2129 = vld [vmem:[%s2113] ss:$9 sm:$0xff]
      %v2130 = vld [vmem:[%s2115] ss:$9 sm:$0xff]
      %v2131 = vld [vmem:[%s2117] ss:$9 sm:$0xff]
      %v2132 = vld [vmem:[%s2119] ss:$9 sm:$0xff]
      %2133 = vst [vmem:[#allocation1] sm:$0xff] %v1081
      %v2134 = vld [vmem:[%s2111] ss:$9 sm:$0xff]
      %v2135 = vld [vmem:[%s2113] ss:$9 sm:$0xff]
      %v2136 = vld [vmem:[%s2115] ss:$9 sm:$0xff]
      %v2137 = vld [vmem:[%s2117] ss:$9 sm:$0xff]
      %v2138 = vld [vmem:[%s2119] ss:$9 sm:$0xff]
      %2139 = vst [vmem:[#allocation1] sm:$0xff] %v1082
      %v2140 = vld [vmem:[%s2111] ss:$9 sm:$0xff]
      %v2141 = vld [vmem:[%s2113] ss:$9 sm:$0xff]
      %v2142 = vld [vmem:[%s2115] ss:$9 sm:$0xff]
      %v2143 = vld [vmem:[%s2117] ss:$9 sm:$0xff]
      %v2144 = vld [vmem:[%s2119] ss:$9 sm:$0xff]
      %v2170 = vld [vmem:[%s6 + $0x9] sm:$0x1]
      %v2171 = vperm.slane %v2170, 0
      %v2173 = vrot.slane %v2171, 1
      %v2174 = vrot.slane %v2171, 2
      %v2175 = vrot.slane %v2171, 3
      %v2176 = vrot.slane %v2171, 4
      %v2177 = vrot.slane %v2171, 5
      %v2178 = vrot.slane %v2171, 6
      %v2179 = vrot.slane %v2171, 7
      %v2187 = vmul.f32 %v2112, %v2171
      %v2188 = vmul.f32 %v2114, %v2173
      %v2189 = vmul.f32 %v2116, %v2174
      %v2190 = vmul.f32 %v2118, %v2175
      %v2191 = vmul.f32 %v2120, %v2176
      %v2192 = vmul.f32 %v2122, %v2177
      %v2193 = vmul.f32 %v2123, %v2178
      %v2194 = vmul.f32 %v2124, %v2179
      %v2195 = vmul.f32 %v2125, %v2171
      %v2196 = vmul.f32 %v2126, %v2173
      %v2197 = vmul.f32 %v2128, %v2174
      %v2198 = vmul.f32 %v2129, %v2175
      %v2199 = vmul.f32 %v2130, %v2176
      %v2200 = vmul.f32 %v2131, %v2177
      %v2201 = vmul.f32 %v2132, %v2178
      %v2202 = vmul.f32 %v2134, %v2179
      %v2203 = vmul.f32 %v2135, %v2171
      %v2204 = vmul.f32 %v2136, %v2173
      %v2205 = vmul.f32 %v2137, %v2174
      %v2206 = vmul.f32 %v2138, %v2175
      %v2207 = vmul.f32 %v2140, %v2176
      %v2208 = vmul.f32 %v2141, %v2177
      %v2209 = vmul.f32 %v2142, %v2178
      %v2210 = vmul.f32 %v2143, %v2179
      %v2211 = vmul.f32 %v2144, %v2171
      %v2212 = vadd.f32 %v2085, %v2187
      %v2213 = vadd.f32 %v2086, %v2188
      %v2214 = vadd.f32 %v2087, %v2189
      %v2215 = vadd.f32 %v2088, %v2190
      %v2216 = vadd.f32 %v2089, %v2191
      %v2217 = vadd.f32 %v2090, %v2192
      %v2218 = vadd.f32 %v2091, %v2193
      %v2219 = vadd.f32 %v2092, %v2194
      %v2220 = vadd.f32 %v2093, %v2195
      %v2221 = vadd.f32 %v2094, %v2196
      %v2222 = vadd.f32 %v2095, %v2197
      %v2223 = vadd.f32 %v2096, %v2198
      %v2224 = vadd.f32 %v2097, %v2199
      %v2225 = vadd.f32 %v2098, %v2200
      %v2226 = vadd.f32 %v2099, %v2201
      %v2227 = vadd.f32 %v2100, %v2202
      %v2228 = vadd.f32 %v2101, %v2203
      %v2229 = vadd.f32 %v2102, %v2204
      %v2230 = vadd.f32 %v2103, %v2205
      %v2231 = vadd.f32 %v2104, %v2206
      %v2232 = vadd.f32 %v2105, %v2207
      %v2233 = vadd.f32 %v2106, %v2208
      %v2234 = vadd.f32 %v2107, %v2209
      %v2235 = vadd.f32 %v2108, %v2210
      %v2236 = vadd.f32 %v2109, %v2211
      %2237 = vst [vmem:[#allocation1] sm:$0xff] %v1078
      %s2238 = scalar_lea.vmem [#allocation1], 2
      %v2239 = vld [vmem:[%s2238] ss:$9 sm:$0xff]
      %s2240 = scalar_lea.vmem [#allocation1], 3
      %v2241 = vld [vmem:[%s2240] ss:$9 sm:$0xff]
      %s2242 = scalar_lea.vmem [#allocation1], 4
      %v2243 = vld [vmem:[%s2242] ss:$9 sm:$0xff]
      %s2244 = scalar_lea.vmem [#allocation1], 5
      %v2245 = vld [vmem:[%s2244] ss:$9 sm:$0xff]
      %s2246 = scalar_lea.vmem [#allocation1], 6
      %v2247 = vld [vmem:[%s2246] ss:$9 sm:$0xff]
      %2248 = vst [vmem:[#allocation1] sm:$0xff] %v1079
      %v2249 = vld [vmem:[%s2238] ss:$9 sm:$0xff]
      %v2250 = vld [vmem:[%s2240] ss:$9 sm:$0xff]
      %v2251 = vld [vmem:[%s2242] ss:$9 sm:$0xff]
      %v2252 = vld [vmem:[%s2244] ss:$9 sm:$0xff]
      %v2253 = vld [vmem:[%s2246] ss:$9 sm:$0xff]
      %2254 = vst [vmem:[#allocation1] sm:$0xff] %v1080
      %v2255 = vld [vmem:[%s2238] ss:$9 sm:$0xff]
      %v2256 = vld [vmem:[%s2240] ss:$9 sm:$0xff]
      %v2257 = vld [vmem:[%s2242] ss:$9 sm:$0xff]
      %v2258 = vld [vmem:[%s2244] ss:$9 sm:$0xff]
      %v2259 = vld [vmem:[%s2246] ss:$9 sm:$0xff]
      %2260 = vst [vmem:[#allocation1] sm:$0xff] %v1081
      %v2261 = vld [vmem:[%s2238] ss:$9 sm:$0xff]
      %v2262 = vld [vmem:[%s2240] ss:$9 sm:$0xff]
      %v2263 = vld [vmem:[%s2242] ss:$9 sm:$0xff]
      %v2264 = vld [vmem:[%s2244] ss:$9 sm:$0xff]
      %v2265 = vld [vmem:[%s2246] ss:$9 sm:$0xff]
      %2266 = vst [vmem:[#allocation1] sm:$0xff] %v1082
      %v2267 = vld [vmem:[%s2238] ss:$9 sm:$0xff]
      %v2268 = vld [vmem:[%s2240] ss:$9 sm:$0xff]
      %v2269 = vld [vmem:[%s2242] ss:$9 sm:$0xff]
      %v2270 = vld [vmem:[%s2244] ss:$9 sm:$0xff]
      %v2271 = vld [vmem:[%s2246] ss:$9 sm:$0xff]
      %v2297 = vld [vmem:[%s6 + $0xa] sm:$0x1]
      %v2298 = vperm.slane %v2297, 0
      %v2300 = vrot.slane %v2298, 1
      %v2301 = vrot.slane %v2298, 2
      %v2302 = vrot.slane %v2298, 3
      %v2303 = vrot.slane %v2298, 4
      %v2304 = vrot.slane %v2298, 5
      %v2305 = vrot.slane %v2298, 6
      %v2306 = vrot.slane %v2298, 7
      %v2314 = vmul.f32 %v2239, %v2298
      %v2315 = vmul.f32 %v2241, %v2300
      %v2316 = vmul.f32 %v2243, %v2301
      %v2317 = vmul.f32 %v2245, %v2302
      %v2318 = vmul.f32 %v2247, %v2303
      %v2319 = vmul.f32 %v2249, %v2304
      %v2320 = vmul.f32 %v2250, %v2305
      %v2321 = vmul.f32 %v2251, %v2306
      %v2322 = vmul.f32 %v2252, %v2298
      %v2323 = vmul.f32 %v2253, %v2300
      %v2324 = vmul.f32 %v2255, %v2301
      %v2325 = vmul.f32 %v2256, %v2302
      %v2326 = vmul.f32 %v2257, %v2303
      %v2327 = vmul.f32 %v2258, %v2304
      %v2328 = vmul.f32 %v2259, %v2305
      %v2329 = vmul.f32 %v2261, %v2306
      %v2330 = vmul.f32 %v2262, %v2298
      %v2331 = vmul.f32 %v2263, %v2300
      %v2332 = vmul.f32 %v2264, %v2301
      %v2333 = vmul.f32 %v2265, %v2302
      %v2334 = vmul.f32 %v2267, %v2303
      %v2335 = vmul.f32 %v2268, %v2304
      %v2336 = vmul.f32 %v2269, %v2305
      %v2337 = vmul.f32 %v2270, %v2306
      %v2338 = vmul.f32 %v2271, %v2298
      %v2339 = vadd.f32 %v2212, %v2314
      %v2340 = vadd.f32 %v2213, %v2315
      %v2341 = vadd.f32 %v2214, %v2316
      %v2342 = vadd.f32 %v2215, %v2317
      %v2343 = vadd.f32 %v2216, %v2318
      %v2344 = vadd.f32 %v2217, %v2319
      %v2345 = vadd.f32 %v2218, %v2320
      %v2346 = vadd.f32 %v2219, %v2321
      %v2347 = vadd.f32 %v2220, %v2322
      %v2348 = vadd.f32 %v2221, %v2323
      %v2349 = vadd.f32 %v2222, %v2324
      %v2350 = vadd.f32 %v2223, %v2325
      %v2351 = vadd.f32 %v2224, %v2326
      %v2352 = vadd.f32 %v2225, %v2327
      %v2353 = vadd.f32 %v2226, %v2328
      %v2354 = vadd.f32 %v2227, %v2329
      %v2355 = vadd.f32 %v2228, %v2330
      %v2356 = vadd.f32 %v2229, %v2331
      %v2357 = vadd.f32 %v2230, %v2332
      %v2358 = vadd.f32 %v2231, %v2333
      %v2359 = vadd.f32 %v2232, %v2334
      %v2360 = vadd.f32 %v2233, %v2335
      %v2361 = vadd.f32 %v2234, %v2336
      %v2362 = vadd.f32 %v2235, %v2337
      %v2363 = vadd.f32 %v2236, %v2338
      %2364 = vst [vmem:[#allocation1] sm:$0xff] %v1078
      %s2365 = scalar_lea.vmem [#allocation1], 3
      %v2366 = vld [vmem:[%s2365] ss:$9 sm:$0xff]
      %s2367 = scalar_lea.vmem [#allocation1], 4
      %v2368 = vld [vmem:[%s2367] ss:$9 sm:$0xff]
      %s2369 = scalar_lea.vmem [#allocation1], 5
      %v2370 = vld [vmem:[%s2369] ss:$9 sm:$0xff]
      %s2371 = scalar_lea.vmem [#allocation1], 6
      %v2372 = vld [vmem:[%s2371] ss:$9 sm:$0xff]
      %s2373 = scalar_lea.vmem [#allocation1], 7
      %v2374 = vld [vmem:[%s2373] ss:$9 sm:$0xff]
      %2375 = vst [vmem:[#allocation1] sm:$0xff] %v1079
      %v2376 = vld [vmem:[%s2365] ss:$9 sm:$0xff]
      %v2377 = vld [vmem:[%s2367] ss:$9 sm:$0xff]
      %v2378 = vld [vmem:[%s2369] ss:$9 sm:$0xff]
      %v2379 = vld [vmem:[%s2371] ss:$9 sm:$0xff]
      %v2380 = vld [vmem:[%s2373] ss:$9 sm:$0xff]
      %2381 = vst [vmem:[#allocation1] sm:$0xff] %v1080
      %v2382 = vld [vmem:[%s2365] ss:$9 sm:$0xff]
      %v2383 = vld [vmem:[%s2367] ss:$9 sm:$0xff]
      %v2384 = vld [vmem:[%s2369] ss:$9 sm:$0xff]
      %v2385 = vld [vmem:[%s2371] ss:$9 sm:$0xff]
      %v2386 = vld [vmem:[%s2373] ss:$9 sm:$0xff]
      %2387 = vst [vmem:[#allocation1] sm:$0xff] %v1081
      %v2388 = vld [vmem:[%s2365] ss:$9 sm:$0xff]
      %v2389 = vld [vmem:[%s2367] ss:$9 sm:$0xff]
      %v2390 = vld [vmem:[%s2369] ss:$9 sm:$0xff]
      %v2391 = vld [vmem:[%s2371] ss:$9 sm:$0xff]
      %v2392 = vld [vmem:[%s2373] ss:$9 sm:$0xff]
      %2393 = vst [vmem:[#allocation1] sm:$0xff] %v1082
      %v2394 = vld [vmem:[%s2365] ss:$9 sm:$0xff]
      %v2395 = vld [vmem:[%s2367] ss:$9 sm:$0xff]
      %v2396 = vld [vmem:[%s2369] ss:$9 sm:$0xff]
      %v2397 = vld [vmem:[%s2371] ss:$9 sm:$0xff]
      %v2398 = vld [vmem:[%s2373] ss:$9 sm:$0xff]
      %v2424 = vld [vmem:[%s6 + $0xb] sm:$0x1]
      %v2425 = vperm.slane %v2424, 0
      %v2427 = vrot.slane %v2425, 1
      %v2428 = vrot.slane %v2425, 2
      %v2429 = vrot.slane %v2425, 3
      %v2430 = vrot.slane %v2425, 4
      %v2431 = vrot.slane %v2425, 5
      %v2432 = vrot.slane %v2425, 6
      %v2433 = vrot.slane %v2425, 7
      %v2441 = vmul.f32 %v2366, %v2425
      %v2442 = vmul.f32 %v2368, %v2427
      %v2443 = vmul.f32 %v2370, %v2428
      %v2444 = vmul.f32 %v2372, %v2429
      %v2445 = vmul.f32 %v2374, %v2430
      %v2446 = vmul.f32 %v2376, %v2431
      %v2447 = vmul.f32 %v2377, %v2432
      %v2448 = vmul.f32 %v2378, %v2433
      %v2449 = vmul.f32 %v2379, %v2425
      %v2450 = vmul.f32 %v2380, %v2427
      %v2451 = vmul.f32 %v2382, %v2428
      %v2452 = vmul.f32 %v2383, %v2429
      %v2453 = vmul.f32 %v2384, %v2430
      %v2454 = vmul.f32 %v2385, %v2431
      %v2455 = vmul.f32 %v2386, %v2432
      %v2456 = vmul.f32 %v2388, %v2433
      %v2457 = vmul.f32 %v2389, %v2425
      %v2458 = vmul.f32 %v2390, %v2427
      %v2459 = vmul.f32 %v2391, %v2428
      %v2460 = vmul.f32 %v2392, %v2429
      %v2461 = vmul.f32 %v2394, %v2430
      %v2462 = vmul.f32 %v2395, %v2431
      %v2463 = vmul.f32 %v2396, %v2432
      %v2464 = vmul.f32 %v2397, %v2433
      %v2465 = vmul.f32 %v2398, %v2425
      %v2466 = vadd.f32 %v2339, %v2441
      %v2467 = vadd.f32 %v2340, %v2442
      %v2468 = vadd.f32 %v2341, %v2443
      %v2469 = vadd.f32 %v2342, %v2444
      %v2470 = vadd.f32 %v2343, %v2445
      %v2471 = vadd.f32 %v2344, %v2446
      %v2472 = vadd.f32 %v2345, %v2447
      %v2473 = vadd.f32 %v2346, %v2448
      %v2474 = vadd.f32 %v2347, %v2449
      %v2475 = vadd.f32 %v2348, %v2450
      %v2476 = vadd.f32 %v2349, %v2451
      %v2477 = vadd.f32 %v2350, %v2452
      %v2478 = vadd.f32 %v2351, %v2453
      %v2479 = vadd.f32 %v2352, %v2454
      %v2480 = vadd.f32 %v2353, %v2455
      %v2481 = vadd.f32 %v2354, %v2456
      %v2482 = vadd.f32 %v2355, %v2457
      %v2483 = vadd.f32 %v2356, %v2458
      %v2484 = vadd.f32 %v2357, %v2459
      %v2485 = vadd.f32 %v2358, %v2460
      %v2486 = vadd.f32 %v2359, %v2461
      %v2487 = vadd.f32 %v2360, %v2462
      %v2488 = vadd.f32 %v2361, %v2463
      %v2489 = vadd.f32 %v2362, %v2464
      %v2490 = vadd.f32 %v2363, %v2465
      %v2492 = vrot.slane %v1083, 1
      %v2493 = vrot.slane %v1083, 2
      %v2494 = vrot.slane %v1083, 3
      %v2495 = vrot.slane %v1083, 4
      %v2500 = vld [vmem:[%s6 + $0xc] sm:$0x1]
      %v2501 = vperm.slane %v2500, 0
      %v2503 = vrot.slane %v2501, 1
      %v2504 = vrot.slane %v2501, 2
      %v2505 = vrot.slane %v2501, 3
      %v2506 = vrot.slane %v2501, 4
      %v2507 = vrot.slane %v2501, 5
      %v2508 = vrot.slane %v2501, 6
      %v2509 = vrot.slane %v2501, 7
      %v2517 = vmul.f32 %v1079, %v2501
      %v2518 = vmul.f32 %v1101, %v2503
      %v2519 = vmul.f32 %v1102, %v2504
      %v2520 = vmul.f32 %v1103, %v2505
      %v2521 = vmul.f32 %v1104, %v2506
      %v2522 = vmul.f32 %v1080, %v2507
      %v2523 = vmul.f32 %v1105, %v2508
      %v2524 = vmul.f32 %v1106, %v2509
      %v2525 = vmul.f32 %v1107, %v2501
      %v2526 = vmul.f32 %v1108, %v2503
      %v2527 = vmul.f32 %v1081, %v2504
      %v2528 = vmul.f32 %v1578, %v2505
      %v2529 = vmul.f32 %v1579, %v2506
      %v2530 = vmul.f32 %v1580, %v2507
      %v2531 = vmul.f32 %v1581, %v2508
      %v2532 = vmul.f32 %v1082, %v2509
      %v2533 = vmul.f32 %v2035, %v2501
      %v2534 = vmul.f32 %v2036, %v2503
      %v2535 = vmul.f32 %v2037, %v2504
      %v2536 = vmul.f32 %v2038, %v2505
      %v2537 = vmul.f32 %v1083, %v2506
      %v2538 = vmul.f32 %v2492, %v2507
      %v2539 = vmul.f32 %v2493, %v2508
      %v2540 = vmul.f32 %v2494, %v2509
      %v2541 = vmul.f32 %v2495, %v2501
      %v2542 = vadd.f32 %v2466, %v2517
      %v2543 = vadd.f32 %v2467, %v2518
      %v2544 = vadd.f32 %v2468, %v2519
      %v2545 = vadd.f32 %v2469, %v2520
      %v2546 = vadd.f32 %v2470, %v2521
      %v2547 = vadd.f32 %v2471, %v2522
      %v2548 = vadd.f32 %v2472, %v2523
      %v2549 = vadd.f32 %v2473, %v2524
      %v2550 = vadd.f32 %v2474, %v2525
      %v2551 = vadd.f32 %v2475, %v2526
      %v2552 = vadd.f32 %v2476, %v2527
      %v2553 = vadd.f32 %v2477, %v2528
      %v2554 = vadd.f32 %v2478, %v2529
      %v2555 = vadd.f32 %v2479, %v2530
      %v2556 = vadd.f32 %v2480, %v2531
      %v2557 = vadd.f32 %v2481, %v2532
      %v2558 = vadd.f32 %v2482, %v2533
      %v2559 = vadd.f32 %v2483, %v2534
      %v2560 = vadd.f32 %v2484, %v2535
      %v2561 = vadd.f32 %v2485, %v2536
      %v2562 = vadd.f32 %v2486, %v2537
      %v2563 = vadd.f32 %v2487, %v2538
      %v2564 = vadd.f32 %v2488, %v2539
      %v2565 = vadd.f32 %v2489, %v2540
      %v2566 = vadd.f32 %v2490, %v2541
      %2567 = vst [vmem:[#allocation1] sm:$0xff] %v1079
      %s2568 = scalar_lea.vmem [#allocation1], 1
      %v2569 = vld [vmem:[%s2568] ss:$9 sm:$0xff]
      %s2570 = scalar_lea.vmem [#allocation1], 2
      %v2571 = vld [vmem:[%s2570] ss:$9 sm:$0xff]
      %s2572 = scalar_lea.vmem [#allocation1], 3
      %v2573 = vld [vmem:[%s2572] ss:$9 sm:$0xff]
      %s2574 = scalar_lea.vmem [#allocation1], 4
      %v2575 = vld [vmem:[%s2574] ss:$9 sm:$0xff]
      %s2576 = scalar_lea.vmem [#allocation1], 5
      %v2577 = vld [vmem:[%s2576] ss:$9 sm:$0xff]
      %2578 = vst [vmem:[#allocation1] sm:$0xff] %v1080
      %v2579 = vld [vmem:[%s2568] ss:$9 sm:$0xff]
      %v2580 = vld [vmem:[%s2570] ss:$9 sm:$0xff]
      %v2581 = vld [vmem:[%s2572] ss:$9 sm:$0xff]
      %v2582 = vld [vmem:[%s2574] ss:$9 sm:$0xff]
      %v2583 = vld [vmem:[%s2576] ss:$9 sm:$0xff]
      %2584 = vst [vmem:[#allocation1] sm:$0xff] %v1081
      %v2585 = vld [vmem:[%s2568] ss:$9 sm:$0xff]
      %v2586 = vld [vmem:[%s2570] ss:$9 sm:$0xff]
      %v2587 = vld [vmem:[%s2572] ss:$9 sm:$0xff]
      %v2588 = vld [vmem:[%s2574] ss:$9 sm:$0xff]
      %v2589 = vld [vmem:[%s2576] ss:$9 sm:$0xff]
      %2590 = vst [vmem:[#allocation1] sm:$0xff] %v1082
      %v2591 = vld [vmem:[%s2568] ss:$9 sm:$0xff]
      %v2592 = vld [vmem:[%s2570] ss:$9 sm:$0xff]
      %v2593 = vld [vmem:[%s2572] ss:$9 sm:$0xff]
      %v2594 = vld [vmem:[%s2574] ss:$9 sm:$0xff]
      %v2595 = vld [vmem:[%s2576] ss:$9 sm:$0xff]
      %2596 = vst [vmem:[#allocation1] sm:$0xff] %v1083
      %v2597 = vld [vmem:[%s2568] ss:$9 sm:$0xff]
      %v2598 = vld [vmem:[%s2570] ss:$9 sm:$0xff]
      %v2599 = vld [vmem:[%s2572] ss:$9 sm:$0xff]
      %v2600 = vld [vmem:[%s2574] ss:$9 sm:$0xff]
      %v2601 = vld [vmem:[%s2576] ss:$9 sm:$0xff]
      %v2627 = vld [vmem:[%s6 + $0xd] sm:$0x1]
      %v2628 = vperm.slane %v2627, 0
      %v2630 = vrot.slane %v2628, 1
      %v2631 = vrot.slane %v2628, 2
      %v2632 = vrot.slane %v2628, 3
      %v2633 = vrot.slane %v2628, 4
      %v2634 = vrot.slane %v2628, 5
      %v2635 = vrot.slane %v2628, 6
      %v2636 = vrot.slane %v2628, 7
      %v2644 = vmul.f32 %v2569, %v2628
      %v2645 = vmul.f32 %v2571, %v2630
      %v2646 = vmul.f32 %v2573, %v2631
      %v2647 = vmul.f32 %v2575, %v2632
      %v2648 = vmul.f32 %v2577, %v2633
      %v2649 = vmul.f32 %v2579, %v2634
      %v2650 = vmul.f32 %v2580, %v2635
      %v2651 = vmul.f32 %v2581, %v2636
      %v2652 = vmul.f32 %v2582, %v2628
      %v2653 = vmul.f32 %v2583, %v2630
      %v2654 = vmul.f32 %v2585, %v2631
      %v2655 = vmul.f32 %v2586, %v2632
      %v2656 = vmul.f32 %v2587, %v2633
      %v2657 = vmul.f32 %v2588, %v2634
      %v2658 = vmul.f32 %v2589, %v2635
      %v2659 = vmul.f32 %v2591, %v2636
      %v2660 = vmul.f32 %v2592, %v2628
      %v2661 = vmul.f32 %v2593, %v2630
      %v2662 = vmul.f32 %v2594, %v2631
      %v2663 = vmul.f32 %v2595, %v2632
      %v2664 = vmul.f32 %v2597, %v2633
      %v2665 = vmul.f32 %v2598, %v2634
      %v2666 = vmul.f32 %v2599, %v2635
      %v2667 = vmul.f32 %v2600, %v2636
      %v2668 = vmul.f32 %v2601, %v2628
      %v2669 = vadd.f32 %v2542, %v2644
      %v2670 = vadd.f32 %v2543, %v2645
      %v2671 = vadd.f32 %v2544, %v2646
      %v2672 = vadd.f32 %v2545, %v2647
      %v2673 = vadd.f32 %v2546, %v2648
      %v2674 = vadd.f32 %v2547, %v2649
      %v2675 = vadd.f32 %v2548, %v2650
      %v2676 = vadd.f32 %v2549, %v2651
      %v2677 = vadd.f32 %v2550, %v2652
      %v2678 = vadd.f32 %v2551, %v2653
      %v2679 = vadd.f32 %v2552, %v2654
      %v2680 = vadd.f32 %v2553, %v2655
      %v2681 = vadd.f32 %v2554, %v2656
      %v2682 = vadd.f32 %v2555, %v2657
      %v2683 = vadd.f32 %v2556, %v2658
      %v2684 = vadd.f32 %v2557, %v2659
      %v2685 = vadd.f32 %v2558, %v2660
      %v2686 = vadd.f32 %v2559, %v2661
      %v2687 = vadd.f32 %v2560, %v2662
      %v2688 = vadd.f32 %v2561, %v2663
      %v2689 = vadd.f32 %v2562, %v2664
      %v2690 = vadd.f32 %v2563, %v2665
      %v2691 = vadd.f32 %v2564, %v2666
      %v2692 = vadd.f32 %v2565, %v2667
      %v2693 = vadd.f32 %v2566, %v2668
      %2694 = vst [vmem:[#allocation1] sm:$0xff] %v1079
      %s2695 = scalar_lea.vmem [#allocation1], 2
      %v2696 = vld [vmem:[%s2695] ss:$9 sm:$0xff]
      %s2697 = scalar_lea.vmem [#allocation1], 3
      %v2698 = vld [vmem:[%s2697] ss:$9 sm:$0xff]
      %s2699 = scalar_lea.vmem [#allocation1], 4
      %v2700 = vld [vmem:[%s2699] ss:$9 sm:$0xff]
      %s2701 = scalar_lea.vmem [#allocation1], 5
      %v2702 = vld [vmem:[%s2701] ss:$9 sm:$0xff]
      %s2703 = scalar_lea.vmem [#allocation1], 6
      %v2704 = vld [vmem:[%s2703] ss:$9 sm:$0xff]
      %2705 = vst [vmem:[#allocation1] sm:$0xff] %v1080
      %v2706 = vld [vmem:[%s2695] ss:$9 sm:$0xff]
      %v2707 = vld [vmem:[%s2697] ss:$9 sm:$0xff]
      %v2708 = vld [vmem:[%s2699] ss:$9 sm:$0xff]
      %v2709 = vld [vmem:[%s2701] ss:$9 sm:$0xff]
      %v2710 = vld [vmem:[%s2703] ss:$9 sm:$0xff]
      %2711 = vst [vmem:[#allocation1] sm:$0xff] %v1081
      %v2712 = vld [vmem:[%s2695] ss:$9 sm:$0xff]
      %v2713 = vld [vmem:[%s2697] ss:$9 sm:$0xff]
      %v2714 = vld [vmem:[%s2699] ss:$9 sm:$0xff]
      %v2715 = vld [vmem:[%s2701] ss:$9 sm:$0xff]
      %v2716 = vld [vmem:[%s2703] ss:$9 sm:$0xff]
      %2717 = vst [vmem:[#allocation1] sm:$0xff] %v1082
      %v2718 = vld [vmem:[%s2695] ss:$9 sm:$0xff]
      %v2719 = vld [vmem:[%s2697] ss:$9 sm:$0xff]
      %v2720 = vld [vmem:[%s2699] ss:$9 sm:$0xff]
      %v2721 = vld [vmem:[%s2701] ss:$9 sm:$0xff]
      %v2722 = vld [vmem:[%s2703] ss:$9 sm:$0xff]
      %2723 = vst [vmem:[#allocation1] sm:$0xff] %v1083
      %v2724 = vld [vmem:[%s2695] ss:$9 sm:$0xff]
      %v2725 = vld [vmem:[%s2697] ss:$9 sm:$0xff]
      %v2726 = vld [vmem:[%s2699] ss:$9 sm:$0xff]
      %v2727 = vld [vmem:[%s2701] ss:$9 sm:$0xff]
      %v2728 = vld [vmem:[%s2703] ss:$9 sm:$0xff]
      %v2754 = vld [vmem:[%s6 + $0xe] sm:$0x1]
      %v2755 = vperm.slane %v2754, 0
      %v2757 = vrot.slane %v2755, 1
      %v2758 = vrot.slane %v2755, 2
      %v2759 = vrot.slane %v2755, 3
      %v2760 = vrot.slane %v2755, 4
      %v2761 = vrot.slane %v2755, 5
      %v2762 = vrot.slane %v2755, 6
      %v2763 = vrot.slane %v2755, 7
      %v2771 = vmul.f32 %v2696, %v2755
      %v2772 = vmul.f32 %v2698, %v2757
      %v2773 = vmul.f32 %v2700, %v2758
      %v2774 = vmul.f32 %v2702, %v2759
      %v2775 = vmul.f32 %v2704, %v2760
      %v2776 = vmul.f32 %v2706, %v2761
      %v2777 = vmul.f32 %v2707, %v2762
      %v2778 = vmul.f32 %v2708, %v2763
      %v2779 = vmul.f32 %v2709, %v2755
      %v2780 = vmul.f32 %v2710, %v2757
      %v2781 = vmul.f32 %v2712, %v2758
      %v2782 = vmul.f32 %v2713, %v2759
      %v2783 = vmul.f32 %v2714, %v2760
      %v2784 = vmul.f32 %v2715, %v2761
      %v2785 = vmul.f32 %v2716, %v2762
      %v2786 = vmul.f32 %v2718, %v2763
      %v2787 = vmul.f32 %v2719, %v2755
      %v2788 = vmul.f32 %v2720, %v2757
      %v2789 = vmul.f32 %v2721, %v2758
      %v2790 = vmul.f32 %v2722, %v2759
      %v2791 = vmul.f32 %v2724, %v2760
      %v2792 = vmul.f32 %v2725, %v2761
      %v2793 = vmul.f32 %v2726, %v2762
      %v2794 = vmul.f32 %v2727, %v2763
      %v2795 = vmul.f32 %v2728, %v2755
      %v2796 = vadd.f32 %v2669, %v2771
      %v2797 = vadd.f32 %v2670, %v2772
      %v2798 = vadd.f32 %v2671, %v2773
      %v2799 = vadd.f32 %v2672, %v2774
      %v2800 = vadd.f32 %v2673, %v2775
      %v2801 = vadd.f32 %v2674, %v2776
      %v2802 = vadd.f32 %v2675, %v2777
      %v2803 = vadd.f32 %v2676, %v2778
      %v2804 = vadd.f32 %v2677, %v2779
      %v2805 = vadd.f32 %v2678, %v2780
      %v2806 = vadd.f32 %v2679, %v2781
      %v2807 = vadd.f32 %v2680, %v2782
      %v2808 = vadd.f32 %v2681, %v2783
      %v2809 = vadd.f32 %v2682, %v2784
      %v2810 = vadd.f32 %v2683, %v2785
      %v2811 = vadd.f32 %v2684, %v2786
      %v2812 = vadd.f32 %v2685, %v2787
      %v2813 = vadd.f32 %v2686, %v2788
      %v2814 = vadd.f32 %v2687, %v2789
      %v2815 = vadd.f32 %v2688, %v2790
      %v2816 = vadd.f32 %v2689, %v2791
      %v2817 = vadd.f32 %v2690, %v2792
      %v2818 = vadd.f32 %v2691, %v2793
      %v2819 = vadd.f32 %v2692, %v2794
      %v2820 = vadd.f32 %v2693, %v2795
      %2821 = vst [vmem:[#allocation1] sm:$0xff] %v1079
      %s2822 = scalar_lea.vmem [#allocation1], 3
      %v2823 = vld [vmem:[%s2822] ss:$9 sm:$0xff]
      %s2824 = scalar_lea.vmem [#allocation1], 4
      %v2825 = vld [vmem:[%s2824] ss:$9 sm:$0xff]
      %s2826 = scalar_lea.vmem [#allocation1], 5
      %v2827 = vld [vmem:[%s2826] ss:$9 sm:$0xff]
      %s2828 = scalar_lea.vmem [#allocation1], 6
      %v2829 = vld [vmem:[%s2828] ss:$9 sm:$0xff]
      %s2830 = scalar_lea.vmem [#allocation1], 7
      %v2831 = vld [vmem:[%s2830] ss:$9 sm:$0xff]
      %2832 = vst [vmem:[#allocation1] sm:$0xff] %v1080
      %v2833 = vld [vmem:[%s2822] ss:$9 sm:$0xff]
      %v2834 = vld [vmem:[%s2824] ss:$9 sm:$0xff]
      %v2835 = vld [vmem:[%s2826] ss:$9 sm:$0xff]
      %v2836 = vld [vmem:[%s2828] ss:$9 sm:$0xff]
      %v2837 = vld [vmem:[%s2830] ss:$9 sm:$0xff]
      %2838 = vst [vmem:[#allocation1] sm:$0xff] %v1081
      %v2839 = vld [vmem:[%s2822] ss:$9 sm:$0xff]
      %v2840 = vld [vmem:[%s2824] ss:$9 sm:$0xff]
      %v2841 = vld [vmem:[%s2826] ss:$9 sm:$0xff]
      %v2842 = vld [vmem:[%s2828] ss:$9 sm:$0xff]
      %v2843 = vld [vmem:[%s2830] ss:$9 sm:$0xff]
      %2844 = vst [vmem:[#allocation1] sm:$0xff] %v1082
      %v2845 = vld [vmem:[%s2822] ss:$9 sm:$0xff]
      %v2846 = vld [vmem:[%s2824] ss:$9 sm:$0xff]
      %v2847 = vld [vmem:[%s2826] ss:$9 sm:$0xff]
      %v2848 = vld [vmem:[%s2828] ss:$9 sm:$0xff]
      %v2849 = vld [vmem:[%s2830] ss:$9 sm:$0xff]
      %2850 = vst [vmem:[#allocation1] sm:$0xff] %v1083
      %v2851 = vld [vmem:[%s2822] ss:$9 sm:$0xff]
      %v2852 = vld [vmem:[%s2824] ss:$9 sm:$0xff]
      %v2853 = vld [vmem:[%s2826] ss:$9 sm:$0xff]
      %v2854 = vld [vmem:[%s2828] ss:$9 sm:$0xff]
      %v2855 = vld [vmem:[%s2830] ss:$9 sm:$0xff]
      %v2881 = vld [vmem:[%s6 + $0xf] sm:$0x1]
      %v2882 = vperm.slane %v2881, 0
      %v2884 = vrot.slane %v2882, 1
      %v2885 = vrot.slane %v2882, 2
      %v2886 = vrot.slane %v2882, 3
      %v2887 = vrot.slane %v2882, 4
      %v2888 = vrot.slane %v2882, 5
      %v2889 = vrot.slane %v2882, 6
      %v2890 = vrot.slane %v2882, 7
      %v2898 = vmul.f32 %v2823, %v2882
      %v2899 = vmul.f32 %v2825, %v2884
      %v2900 = vmul.f32 %v2827, %v2885
      %v2901 = vmul.f32 %v2829, %v2886
      %v2902 = vmul.f32 %v2831, %v2887
      %v2903 = vmul.f32 %v2833, %v2888
      %v2904 = vmul.f32 %v2834, %v2889
      %v2905 = vmul.f32 %v2835, %v2890
      %v2906 = vmul.f32 %v2836, %v2882
      %v2907 = vmul.f32 %v2837, %v2884
      %v2908 = vmul.f32 %v2839, %v2885
      %v2909 = vmul.f32 %v2840, %v2886
      %v2910 = vmul.f32 %v2841, %v2887
      %v2911 = vmul.f32 %v2842, %v2888
      %v2912 = vmul.f32 %v2843, %v2889
      %v2913 = vmul.f32 %v2845, %v2890
      %v2914 = vmul.f32 %v2846, %v2882
      %v2915 = vmul.f32 %v2847, %v2884
      %v2916 = vmul.f32 %v2848, %v2885
      %v2917 = vmul.f32 %v2849, %v2886
      %v2918 = vmul.f32 %v2851, %v2887
      %v2919 = vmul.f32 %v2852, %v2888
      %v2920 = vmul.f32 %v2853, %v2889
      %v2921 = vmul.f32 %v2854, %v2890
      %v2922 = vmul.f32 %v2855, %v2882
      %v2923 = vadd.f32 %v2796, %v2898
      %v2924 = vadd.f32 %v2797, %v2899
      %v2925 = vadd.f32 %v2798, %v2900
      %v2926 = vadd.f32 %v2799, %v2901
      %v2927 = vadd.f32 %v2800, %v2902
      %v2928 = vadd.f32 %v2801, %v2903
      %v2929 = vadd.f32 %v2802, %v2904
      %v2930 = vadd.f32 %v2803, %v2905
      %v2931 = vadd.f32 %v2804, %v2906
      %v2932 = vadd.f32 %v2805, %v2907
      %v2933 = vadd.f32 %v2806, %v2908
      %v2934 = vadd.f32 %v2807, %v2909
      %v2935 = vadd.f32 %v2808, %v2910
      %v2936 = vadd.f32 %v2809, %v2911
      %v2937 = vadd.f32 %v2810, %v2912
      %v2938 = vadd.f32 %v2811, %v2913
      %v2939 = vadd.f32 %v2812, %v2914
      %v2940 = vadd.f32 %v2813, %v2915
      %v2941 = vadd.f32 %v2814, %v2916
      %v2942 = vadd.f32 %v2815, %v2917
      %v2943 = vadd.f32 %v2816, %v2918
      %v2944 = vadd.f32 %v2817, %v2919
      %v2945 = vadd.f32 %v2818, %v2920
      %v2946 = vadd.f32 %v2819, %v2921
      %v2947 = vadd.f32 %v2820, %v2922
      %2973 = vst [vmem:[#allocation1] ss:$9 sm:$0xff] %v2923
      %s2974 = scalar_lea.vmem [#allocation1], 1
      %2975 = vst [vmem:[%s2974] ss:$9 sm:$0xff] %v2924
      %s2976 = scalar_lea.vmem [#allocation1], 2
      %2977 = vst [vmem:[%s2976] ss:$9 sm:$0xff] %v2925
      %s2978 = scalar_lea.vmem [#allocation1], 3
      %2979 = vst [vmem:[%s2978] ss:$9 sm:$0xff] %v2926
      %s2980 = scalar_lea.vmem [#allocation1], 4
      %2981 = vst [vmem:[%s2980] ss:$9 sm:$0xff] %v2927
      %s2982 = scalar_lea.vmem [#allocation1], 5
      %2983 = vst [vmem:[%s2982] ss:$9 sm:$0xff] %v2928
      %s2984 = scalar_lea.vmem [#allocation1], 6
      %2985 = vst [vmem:[%s2984] ss:$9 sm:$0xff] %v2929
      %s2986 = scalar_lea.vmem [#allocation1], 7
      %2987 = vst [vmem:[%s2986] ss:$9 sm:$0xff] %v2930
      %v2988 = vld [vmem:[#allocation1] sm:$0xff]
      %2989 = vst [vmem:[#allocation1] ss:$9 sm:$0xff] %v2931
      %2990 = vst [vmem:[%s2974] ss:$9 sm:$0xff] %v2932
      %2991 = vst [vmem:[%s2976] ss:$9 sm:$0xff] %v2933
      %2992 = vst [vmem:[%s2978] ss:$9 sm:$0xff] %v2934
      %2993 = vst [vmem:[%s2980] ss:$9 sm:$0xff] %v2935
      %2994 = vst [vmem:[%s2982] ss:$9 sm:$0xff] %v2936
      %2995 = vst [vmem:[%s2984] ss:$9 sm:$0xff] %v2937
      %2996 = vst [vmem:[%s2986] ss:$9 sm:$0xff] %v2938
      %v2997 = vld [vmem:[#allocation1] sm:$0xff]
      %2998 = vst [vmem:[#allocation1] ss:$9 sm:$0xff] %v2939
      %2999 = vst [vmem:[%s2974] ss:$9 sm:$0xff] %v2940
      %3000 = vst [vmem:[%s2976] ss:$9 sm:$0xff] %v2941
      %3001 = vst [vmem:[%s2978] ss:$9 sm:$0xff] %v2942
      %3002 = vst [vmem:[%s2980] ss:$9 sm:$0xff] %v2943
      %3003 = vst [vmem:[%s2982] ss:$9 sm:$0xff] %v2944
      %3004 = vst [vmem:[%s2984] ss:$9 sm:$0xff] %v2945
      %3005 = vst [vmem:[%s2986] ss:$9 sm:$0xff] %v2946
      %v3006 = vld [vmem:[#allocation1] sm:$0xff]
      %3007 = vst [vmem:[#allocation1] ss:$9 sm:$0xff] %v2947
      %v3008 = vld [vmem:[#allocation1] sm:$0xff]
      %vm3013 = vcmask 261120
      %v3014 = vsel %vm3013, %v2988, 0.0
      %3015 = vadd.xlane.f32.xlu0 %v3014
      %v3016 = vpop.xlane.xlu0 %3015
      %v3017 = vsel %vm3013, %v2997, 0.0
      %3018 = vadd.xlane.f32.xlu0 %v3017
      %v3019 = vpop.xlane.xlu0 %3018
      %v3020 = vsel %vm3013, %v3006, 0.0
      %3021 = vadd.xlane.f32.xlu0 %v3020
      %v3022 = vpop.xlane.xlu0 %3021
      %vm3023 = vcmask 253952
      %v3024 = vsel %vm3023, %v3008, 0.0
      %3025 = vadd.xlane.f32.xlu0 %v3024
      %v3026 = vpop.xlane.xlu0 %3025
      %v3031 = vlaneseq
      %v3032 = vand.u32 %v3031, 127
      %v3033 = vperm.slane %v3016, %v3032
      %v3034 = vadd.s32 %v3032, 4294967288
      %v3035 = vperm.slane %v3019, %v3034
      %vm3036 = vcmask 130112
      %v3037 = vsel %vm3036, %v3035, %v3033
      %v3038 = vadd.s32 %v3032, 4294967280
      %v3039 = vperm.slane %v3022, %v3038
      %vm3040 = vcmask 195712
      %v3041 = vsel %vm3040, %v3039, %v3037
      %v3042 = vadd.s32 %v3032, 4294967272
      %v3043 = vperm.slane %v3026, %v3042
      %vm3044 = vcmask 261312
      %v3045 = vsel %vm3044, %v3043, %v3041
      %vm3047 = vcmask 196608
      %3048 = vst.msk [vmem:[%s274] sm:$0x1] %vm3047, %v3045
      %p3049 = scmp.lt.s32.totalorder %s18, 1
      %s3050 = scalar_select %p3049, %s18, 1
      %s3051 = scalar_lea.vmem %s7, %s3050
      // Predicated region
      $region49: #{_fused_forward.1} parent=47 // pred_check
        %p3052 = pneg %p188
      $region50: #{_fused_forward.1} parent=47 // pred_check_branch
        %3054 = sbr.rel (%p3052) target = $region52
      $region51: #{_fused_forward.1} parent=47 // pred_region
        _
      $region52: #{_fused_forward.1} parent=47 // pred_fallthru
        _
    $region48: #{_fused_forward.1} parent=5 // pred_fallthru
      _
    %p3055 = scmp.le.s32.totalorder 2, %s13
    // Predicated region
    $region53: #{_fused_forward.1} parent=5 // pred_check
      %p3056 = pneg %p3055
    $region54: #{_fused_forward.1} parent=5 // pred_check_branch
      %3058 = sbr.rel (%p3056) target = $region56
    $region55: #{_fused_forward.1} parent=5 // pred_region
      %s3059 = ssub.s32 %s13, 2
      // Predicated region
      $region57: #{_fused_forward.1} parent=55 // pred_check
        %p3060 = pneg %p194
      $region58: #{_fused_forward.1} parent=55 // pred_check_branch
        %3062 = sbr.rel (%p3060) target = $region60
      $region59: #{_fused_forward.1} parent=55 // pred_region
        %p3063 = scmp.lt.s32.totalorder %s19, 1
        %s3064 = scalar_select %p3063, %s19, 1
        %s3065 = scalar_lea.vmem %s7, %s3064
      $region60: #{_fused_forward.1} parent=55 // pred_fallthru
        _
    $region56: #{_fused_forward.1} parent=5 // pred_fallthru
      _
  $region6: #{_fused_forward.1} parent=0 // loop_footer
    %s17 = sadd.s32 1, %s13
  $region7: #{_fused_forward.1} parent=0 // loop_footer_branch
    %12 = sbr.rel target = $region3
  $region8: #{_fused_forward.1} parent=0 // loop_exit
    _

</llo_original>
